<compile_context>
chip_gen: v7x
topology: tpu7x:2x2x1
jax: 0.10.0
libtpu: 0.0.40
codegen_flags: <defaults>
</compile_context>

<pallas_src>
import functools

import jax
import jax.numpy as jnp
from jax.experimental import pallas as pl
from jax.experimental.pallas import tpu as pltpu

LANE = 128
_VMEM_LIMIT = 32 * 1024 * 1024  # safe on v5e/v6e (128 MiB) and v7x (64 MiB)


def _round_up(x, m):
    return (x + m - 1) // m * m


def _pad2d(a, rows, cols):
    out = jnp.zeros((rows, cols), a.dtype)
    return out.at[: a.shape[0], : a.shape[1]].set(a)


def _compiler_params():
    return pltpu.CompilerParams(
        dimension_semantics=("parallel",),
        vmem_limit_bytes=_VMEM_LIMIT,
    )


# ----------------------------------------------------------------------------
# Kernel 1: fused conv3x3 + ReLU + global average pool (backbone)
# ----------------------------------------------------------------------------
def _backbone_kernel(x_ref, w_ref, b_ref, emb_ref, *, H, W, Cin, Kpad):
    """One batch sample per grid step: conv3x3(pad=1) + ReLU + GAP."""
    xp = x_ref[0]                                         # (H+2, W+2, Cin) halo tile
    cols = []
    for kh in range(3):
        for kw in range(3):
            # im2col built in VMEM only (never materialised in HBM).
            cols.append(xp[kh:kh + H, kw:kw + W, :].reshape(H * W, Cin))
    if Kpad > 9 * Cin:                                    # pad K to a multiple of 8
        cols.append(jnp.zeros((H * W, Kpad - 9 * Cin), dtype=xp.dtype))
    patches = jnp.concatenate(cols, axis=-1)              # (H*W, Kpad)
    feat = jnp.dot(patches, w_ref[...], preferred_element_type=jnp.float32)
    feat = jnp.maximum(feat + b_ref[...], 0.0)            # f32 bias + ReLU epilogue
    emb = jnp.sum(feat, axis=0, keepdims=True) * (1.0 / (H * W))   # GAP, (1, Cpad)
    emb_ref[...] = emb.reshape(1, 1, -1).astype(emb_ref.dtype)


def backbone_pallas(x_nchw, conv_w, conv_b, *, compute_dtype=jnp.float32):
    """Returns a (N, 128)-padded f32 embedding; columns >= Cemb are exactly 0."""
    N, Cin, H, W = x_nchw.shape
    Cemb = conv_w.shape[-1]
    K = 9 * Cin
    Kpad = _round_up(K, 8)
    Cpad = _round_up(Cemb, LANE)

    x_nhwc = jnp.transpose(x_nchw, (0, 2, 3, 1))          # NCHW -> NHWC
    x_halo = jnp.pad(x_nhwc, ((0, 0), (1, 1), (1, 1), (0, 0))).astype(compute_dtype)
    w_pad = _pad2d(conv_w.reshape(K, Cemb), Kpad, Cpad).astype(compute_dtype)
    b_pad = _pad2d(conv_b.reshape(1, -1), 1, Cpad).astype(jnp.float32)

    # TODO(synk): for large H*W add a spatial ("arbitrary") grid axis and
    # accumulate the per-sample channel sum in VMEM scratch via pl.when.
    emb_pad = pl.pallas_call(
        functools.partial(_backbone_kernel, H=H, W=W, Cin=Cin, Kpad=Kpad),
        out_shape=jax.ShapeDtypeStruct((N, 1, Cpad), jnp.float32),
        grid=(N,),
        in_specs=[
            pl.BlockSpec((1, H + 2, W + 2, Cin), lambda n: (n, 0, 0, 0)),
            pl.BlockSpec((Kpad, Cpad), lambda n: (0, 0)),
            pl.BlockSpec((1, Cpad), lambda n: (0, 0)),
        ],
        out_specs=pl.BlockSpec((1, 1, Cpad), lambda n: (n, 0, 0)),
        compiler_params=_compiler_params(),
    )(x_halo, w_pad, b_pad)
    return emb_pad[:, 0, :]                               # (N, Cpad)


# ----------------------------------------------------------------------------
# Kernel 2: fused projector + predictor + classifier + l2-normalisation (heads)
# ----------------------------------------------------------------------------
def _heads_kernel(emb_ref, p1w_ref, p1b_ref, p2w_ref, p2b_ref,
                  q1w_ref, q1b_ref, q2w_ref, q2b_ref, cw_ref, cb_ref,
                  proj_ref, pred_ref, logit_ref, *, eps):
    f32 = jnp.float32
    emb = emb_ref[...]                                    # (TM, 128)
    # projector MLP
    h = jnp.maximum(
        jnp.dot(emb, p1w_ref[...], preferred_element_type=f32) + p1b_ref[...], 0.0)
    proj = jnp.dot(h, p2w_ref[...], preferred_element_type=f32) + p2b_ref[...]
    # predictor MLP
    h2 = jnp.maximum(
        jnp.dot(proj, q1w_ref[...], preferred_element_type=f32) + q1b_ref[...], 0.0)
    pred = jnp.dot(h2, q2w_ref[...], preferred_element_type=f32) + q2b_ref[...]
    # classifier on the (detached) embedding.
    # TODO(synk): .detach() only affects the backward pass; a custom VJP would be
    # needed to train through these kernels. Forward math is identical.
    logits = jnp.dot(emb, cw_ref[...], preferred_element_type=f32) + cb_ref[...]
    # l2_norm: padded columns are exactly zero, so the 128-lane norm is exact.
    proj_n = proj * jax.lax.rsqrt(jnp.sum(proj * proj, axis=-1, keepdims=True) + eps)
    pred_n = pred * jax.lax.rsqrt(jnp.sum(pred * pred, axis=-1, keepdims=True) + eps)
    proj_ref[...] = proj_n.astype(proj_ref.dtype)
    pred_ref[...] = pred_n.astype(pred_ref.dtype)
    logit_ref[...] = logits.astype(logit_ref.dtype)


def heads_pallas(emb_pad, params, *, eps=1e-12):
    N, Cpad = emb_pad.shape
    tm = 256 if N >= 256 else _round_up(N, 8)
    Npad = _round_up(N, tm)

    Hid = params["proj_w1"].shape[1]
    Dp = params["proj_w2"].shape[1]
    Ncls = params["cls_w"].shape[1]
    Hpad = _round_up(Hid, LANE)
    Dpad = _round_up(Dp, LANE)
    Lpad = _round_up(Ncls, LANE)

    f32 = jnp.float32
    emb_rows = jnp.zeros((Npad, Cpad), f32).at[:N].set(emb_pad)
    p1w = _pad2d(params["proj_w1"], Cpad, Hpad).astype(f32)
    p1b = _pad2d(params["proj_b1"].reshape(1, -1), 1, Hpad).astype(f32)
    p2w = _pad2d(params["proj_w2"], Hpad, Dpad).astype(f32)
    p2b = _pad2d(params["proj_b2"].reshape(1, -1), 1, Dpad).astype(f32)
    q1w = _pad2d(params["pred_w1"], Dpad, Hpad).astype(f32)
    q1b = _pad2d(params["pred_b1"].reshape(1, -1), 1, Hpad).astype(f32)
    q2w = _pad2d(params["pred_w2"], Hpad, Dpad).astype(f32)
    q2b = _pad2d(params["pred_b2"].reshape(1, -1), 1, Dpad).astype(f32)
    cw = _pad2d(params["cls_w"], Cpad, Lpad).astype(f32)
    cb = _pad2d(params["cls_b"].reshape(1, -1), 1, Lpad).astype(f32)

    row_in = pl.BlockSpec((tm, Cpad), lambda i: (i, 0))
    full = lambda r, c: pl.BlockSpec((r, c), lambda i: (0, 0))

    proj_n, pred_n, logits = pl.pallas_call(
        functools.partial(_heads_kernel, eps=eps),
        out_shape=(
            jax.ShapeDtypeStruct((Npad, Dpad), f32),
            jax.ShapeDtypeStruct((Npad, Dpad), f32),
            jax.ShapeDtypeStruct((Npad, Lpad), f32),
        ),
        grid=(Npad // tm,),
        in_specs=[
            row_in,
            full(Cpad, Hpad), full(1, Hpad),
            full(Hpad, Dpad), full(1, Dpad),
            full(Dpad, Hpad), full(1, Hpad),
            full(Hpad, Dpad), full(1, Dpad),
            full(Cpad, Lpad), full(1, Lpad),
        ],
        out_specs=(
            pl.BlockSpec((tm, Dpad), lambda i: (i, 0)),
            pl.BlockSpec((tm, Dpad), lambda i: (i, 0)),
            pl.BlockSpec((tm, Lpad), lambda i: (i, 0)),
        ),
        compiler_params=_compiler_params(),
    )(emb_rows, p1w, p1b, p2w, p2b, q1w, q1b, q2w, q2b, cw, cb)

    return proj_n[:N, :Dp], pred_n[:N, :Dp], logits[:N, :Ncls]


# ----------------------------------------------------------------------------
# Lane-dense padded linear (used by forward_cla)
# ----------------------------------------------------------------------------
def _linear_kernel(x_ref, w_ref, b_ref, o_ref):
    acc = jnp.dot(x_ref[...], w_ref[...], preferred_element_type=jnp.float32)
    o_ref[...] = (acc + b_ref[...]).astype(o_ref.dtype)


def linear_pallas(x, w, b):
    M, K = x.shape
    Nc = w.shape[1]
    tm = 256 if M >= 256 else _round_up(M, 8)
    Mp = _round_up(M, tm)
    Kp = _round_up(K, 8)
    Np = _round_up(Nc, LANE)
    xp = _pad2d(x, Mp, Kp)
    wp = _pad2d(w, Kp, Np)
    bp = _pad2d(b.reshape(1, -1), 1, Np)
    out = pl.pallas_call(
        _linear_kernel,
        out_shape=jax.ShapeDtypeStruct((Mp, Np), jnp.float32),
        grid=(Mp // tm,),
        in_specs=[
            pl.BlockSpec((tm, Kp), lambda i: (i, 0)),
            pl.BlockSpec((Kp, Np), lambda i: (0, 0)),
            pl.BlockSpec((1, Np), lambda i: (0, 0)),
        ],
        out_specs=pl.BlockSpec((tm, Np), lambda i: (i, 0)),
        compiler_params=_compiler_params(),
    )(xp, wp, bp)
    return out[:M, :Nc]


# ----------------------------------------------------------------------------
# ByolWrapper forward
# ----------------------------------------------------------------------------
def byol_forward(x_nchw, params, y=None, *, compute_dtype=jnp.float32):
    """ByolWrapper.forward.  compute_dtype=jnp.bfloat16 halves conv-path HBM
    bytes on v6e/v7x (accumulation stays f32); default f32 everywhere."""
    Cemb = params["conv_w"].shape[-1]
    emb_pad = backbone_pallas(x_nchw, params["conv_w"], params["conv_b"],
                              compute_dtype=compute_dtype)
    embedding = emb_pad[:, :Cemb]
    proj_n, pred_n, logit_cla = heads_pallas(emb_pad, params)
    if y is not None:
        return embedding, proj_n
    return proj_n, pred_n, logit_cla


def forward_cla(x_emb, params):
    """ByolWrapper.forward_cla: classifier applied directly to an embedding."""
    return linear_pallas(x_emb, params["cls_w"], params["cls_b"])


# ----------------------------------------------------------------------------
# Pure-JAX reference (for correctness check)
# ----------------------------------------------------------------------------
def _l2_normalize(x, eps=1e-12):
    return x * jax.lax.rsqrt(jnp.sum(x * x, axis=-1, keepdims=True) + eps)


def reference_forward(x_nchw, params):
    N, Cin, H, W = x_nchw.shape
    x_nhwc = jnp.transpose(x_nchw, (0, 2, 3, 1))
    xp = jnp.pad(x_nhwc, ((0, 0), (1, 1), (1, 1), (0, 0)))
    cols = [xp[:, kh:kh + H, kw:kw + W, :] for kh in range(3) for kw in range(3)]
    patches = jnp.concatenate(cols, axis=-1).reshape(N * H * W, 9 * Cin)
    w = params["conv_w"].reshape(9 * Cin, -1)
    feat = jnp.maximum(patches @ w + params["conv_b"].reshape(1, -1), 0.0)
    emb = feat.reshape(N, H * W, -1).mean(axis=1)
    h = jnp.maximum(emb @ params["proj_w1"] + params["proj_b1"], 0.0)
    proj = h @ params["proj_w2"] + params["proj_b2"]
    h2 = jnp.maximum(proj @ params["pred_w1"] + params["pred_b1"], 0.0)
    pred = h2 @ params["pred_w2"] + params["pred_b2"]
    logits = emb @ params["cls_w"] + params["cls_b"]
    return _l2_normalize(proj), _l2_normalize(pred), logits, emb


# ----------------------------------------------------------------------------
# Main
# ----------------------------------------------------------------------------
if __name__ == "__main__":
    key = jax.random.PRNGKey(0)
    N, Cin, H, W = 2, 4, 16, 16
    CEMB, HID, DPROJ, NUM_CLASSES = 32, 64, 32, 10

    keys = jax.random.split(key, 12)
    x = jax.random.normal(keys[0], (N, Cin, H, W), dtype=jnp.float32)

    def _w(k, shape):
        return 0.1 * jax.random.normal(k, shape, jnp.float32)

    # TODO(synk): BYOL projector/predictor normally include BatchNorm; omitted
    # here (inference-mode BN affine could be folded into the linear weights).
    params = {
        "conv_w": _w(keys[1], (3, 3, Cin, CEMB)),
        "conv_b": _w(keys[2], (CEMB,)),
        "proj_w1": _w(keys[3], (CEMB, HID)),
        "proj_b1": _w(keys[4], (HID,)),
        "proj_w2": _w(keys[5], (HID, DPROJ)),
        "proj_b2": _w(keys[6], (DPROJ,)),
        "pred_w1": _w(keys[7], (DPROJ, HID)),
        "pred_b1": _w(keys[8], (HID,)),
        "pred_w2": _w(keys[9], (HID, DPROJ)),
        "pred_b2": _w(keys[10], (DPROJ,)),
        "cls_w": _w(keys[11], (CEMB, NUM_CLASSES)),
        "cls_b": jnp.zeros((NUM_CLASSES,), jnp.float32),
    }

    proj_n, pred_n, logit_cla = jax.block_until_ready(byol_forward(x, params))

    p_ref, q_ref, l_ref, e_ref = reference_forward(x, params)
    assert proj_n.shape == (N, DPROJ) and pred_n.shape == (N, DPROJ)
    assert logit_cla.shape == (N, NUM_CLASSES)
    assert jnp.allclose(proj_n, p_ref, rtol=1e-4, atol=1e-4)
    assert jnp.allclose(pred_n, q_ref, rtol=1e-4, atol=1e-4)
    assert jnp.allclose(logit_cla, l_ref, rtol=1e-4, atol=1e-4)

    # y-is-not-None path: returns (embedding, normalize(proj_out))
    emb_out, proj_n2 = byol_forward(x, params, y=jnp.zeros((N,), jnp.int32))
    assert jnp.allclose(emb_out, e_ref, rtol=1e-4, atol=1e-4)
    assert jnp.allclose(proj_n2, p_ref, rtol=1e-4, atol=1e-4)

    # forward_cla on an embedding
    cla = jax.block_until_ready(forward_cla(e_ref, params))
    assert jnp.allclose(cla, l_ref, rtol=1e-4, atol=1e-4)

    print("KERNEL_OK")
</pallas_src>

<mosaic_0001>
module attributes {stable_mosaic.version = 11 : i64} {
  func.func @_backbone_kernel(%arg0: i32, %arg1: memref<1x18x18x4xf32, #tpu.memory_space<vmem>>, %arg2: memref<40x128xf32, #tpu.memory_space<vmem>>, %arg3: memref<1x128xf32, #tpu.memory_space<vmem>>, %arg4: memref<1x1x128xf32, #tpu.memory_space<vmem>>) attributes {dimension_semantics = [#tpu.dimension_semantics<parallel>], iteration_bounds = array<i64: 2>, scalar_prefetch = 0 : i64, scratch_operands = 0 : i64, tpu.core_type = #tpu.core_type<tc>, window_params = [{transform_indices = @transform_0, window_bounds = array<i64: 1, 18, 18, 4>}, {pipeline_mode = #tpu.pipeline_mode<synchronous>, transform_indices = @transform_1, window_bounds = array<i64: 40, 128>}, {pipeline_mode = #tpu.pipeline_mode<synchronous>, transform_indices = @transform_2, window_bounds = array<i64: 1, 128>}, {transform_indices = @transform_3, window_bounds = array<i64: 1, 1, 128>}]} {
    %c0 = arith.constant 0 : index
    %c0_0 = arith.constant 0 : index
    %c0_1 = arith.constant 0 : index
    %c0_2 = arith.constant 0 : index
    %0 = vector.load %arg1[%c0, %c0_0, %c0_1, %c0_2] : memref<1x18x18x4xf32, #tpu.memory_space<vmem>>, vector<1x18x18x4xf32>
    %1 = vector.shape_cast %0 : vector<1x18x18x4xf32> to vector<18x18x4xf32>
    %2 = vector.extract_strided_slice %1 {offsets = [0, 0, 0], sizes = [16, 16, 4], strides = [1, 1, 1]} : vector<18x18x4xf32> to vector<16x16x4xf32>
    %3 = vector.shape_cast %2 : vector<16x16x4xf32> to vector<256x4xf32>
    %4 = vector.extract_strided_slice %1 {offsets = [0, 1, 0], sizes = [16, 16, 4], strides = [1, 1, 1]} : vector<18x18x4xf32> to vector<16x16x4xf32>
    %5 = vector.shape_cast %4 : vector<16x16x4xf32> to vector<256x4xf32>
    %6 = vector.extract_strided_slice %1 {offsets = [0, 2, 0], sizes = [16, 16, 4], strides = [1, 1, 1]} : vector<18x18x4xf32> to vector<16x16x4xf32>
    %7 = vector.shape_cast %6 : vector<16x16x4xf32> to vector<256x4xf32>
    %8 = vector.extract_strided_slice %1 {offsets = [1, 0, 0], sizes = [16, 16, 4], strides = [1, 1, 1]} : vector<18x18x4xf32> to vector<16x16x4xf32>
    %9 = vector.shape_cast %8 : vector<16x16x4xf32> to vector<256x4xf32>
    %10 = vector.extract_strided_slice %1 {offsets = [1, 1, 0], sizes = [16, 16, 4], strides = [1, 1, 1]} : vector<18x18x4xf32> to vector<16x16x4xf32>
    %11 = vector.shape_cast %10 : vector<16x16x4xf32> to vector<256x4xf32>
    %12 = vector.extract_strided_slice %1 {offsets = [1, 2, 0], sizes = [16, 16, 4], strides = [1, 1, 1]} : vector<18x18x4xf32> to vector<16x16x4xf32>
    %13 = vector.shape_cast %12 : vector<16x16x4xf32> to vector<256x4xf32>
    %14 = vector.extract_strided_slice %1 {offsets = [2, 0, 0], sizes = [16, 16, 4], strides = [1, 1, 1]} : vector<18x18x4xf32> to vector<16x16x4xf32>
    %15 = vector.shape_cast %14 : vector<16x16x4xf32> to vector<256x4xf32>
    %16 = vector.extract_strided_slice %1 {offsets = [2, 1, 0], sizes = [16, 16, 4], strides = [1, 1, 1]} : vector<18x18x4xf32> to vector<16x16x4xf32>
    %17 = vector.shape_cast %16 : vector<16x16x4xf32> to vector<256x4xf32>
    %18 = vector.extract_strided_slice %1 {offsets = [2, 2, 0], sizes = [16, 16, 4], strides = [1, 1, 1]} : vector<18x18x4xf32> to vector<16x16x4xf32>
    %19 = vector.shape_cast %18 : vector<16x16x4xf32> to vector<256x4xf32>
    %cst = arith.constant 0.000000e+00 : f32
    %20 = vector.broadcast %cst : f32 to vector<256x4xf32>
    %21 = tpu.concatenate %3, %5, %7, %9, %11, %13, %15, %17, %19, %20 in 1 : vector<256x4xf32>, vector<256x4xf32>, vector<256x4xf32>, vector<256x4xf32>, vector<256x4xf32>, vector<256x4xf32>, vector<256x4xf32>, vector<256x4xf32>, vector<256x4xf32>, vector<256x4xf32> -> vector<256x40xf32>
    %c0_3 = arith.constant 0 : index
    %c0_4 = arith.constant 0 : index
    %22 = vector.load %arg2[%c0_3, %c0_4] : memref<40x128xf32, #tpu.memory_space<vmem>>, vector<40x128xf32>
    %cst_5 = arith.constant dense<0.000000e+00> : vector<256x128xf32>
    %23 = tpu.matmul %21, %22, %cst_5 {dimension_numbers = #tpu.dot_dimension_numbers<[1], [0], [0], [1], [0, 0, 1, 1], [], []>} : vector<256x40xf32>, vector<40x128xf32>, vector<256x128xf32> -> vector<256x128xf32>
    %c0_6 = arith.constant 0 : index
    %c0_7 = arith.constant 0 : index
    %24 = vector.load %arg3[%c0_6, %c0_7] : memref<1x128xf32, #tpu.memory_space<vmem>>, vector<1x128xf32>
    %25 = vector.broadcast %24 : vector<1x128xf32> to vector<256x128xf32>
    %26 = arith.addf %23, %25 : vector<256x128xf32>
    %cst_8 = arith.constant 0.000000e+00 : f32
    %27 = vector.broadcast %cst_8 : f32 to vector<256x128xf32>
    %28 = arith.maximumf %26, %27 : vector<256x128xf32>
    %cst_9 = arith.constant dense<0.000000e+00> : vector<128xf32>
    %29 = vector.multi_reduction <add>, %28, %cst_9 [0] : vector<256x128xf32> to vector<128xf32>
    %30 = vector.shape_cast %29 : vector<128xf32> to vector<1x128xf32>
    %cst_10 = arith.constant 3.906250e-03 : f32
    %31 = vector.broadcast %cst_10 : f32 to vector<1x128xf32>
    %32 = arith.mulf %30, %31 : vector<1x128xf32>
    %33 = vector.shape_cast %32 : vector<1x128xf32> to vector<1x1x128xf32>
    %c0_11 = arith.constant 0 : index
    %c0_12 = arith.constant 0 : index
    %c0_13 = arith.constant 0 : index
    %34 = vector.load %arg4[%c0_11, %c0_12, %c0_13] : memref<1x1x128xf32, #tpu.memory_space<vmem>>, vector<1x1x128xf32>
    tpu.vector_store %arg4[%c0_11, %c0_12, %c0_13], %33 {strides = array<i32>} : memref<1x1x128xf32, #tpu.memory_space<vmem>>, vector<1x1x128xf32>,
    return
  }
  func.func @transform_0(%arg0: i32) -> (i32, i32, i32, i32) {
    %c0_i32 = arith.constant 0 : i32
    %c0_i32_0 = arith.constant 0 : i32
    %c0_i32_1 = arith.constant 0 : i32
    %c0_i32_2 = arith.constant 0 : i32
    return %arg0, %c0_i32, %c0_i32_0, %c0_i32_1 : i32, i32, i32, i32
  }
  func.func @transform_1(%arg0: i32) -> (i32, i32) {
    %c0_i32 = arith.constant 0 : i32
    %c0_i32_0 = arith.constant 0 : i32
    %c0_i32_1 = arith.constant 0 : i32
    return %c0_i32, %c0_i32_0 : i32, i32
  }
  func.func @transform_2(%arg0: i32) -> (i32, i32) {
    %c0_i32 = arith.constant 0 : i32
    %c0_i32_0 = arith.constant 0 : i32
    %c0_i32_1 = arith.constant 0 : i32
    return %c0_i32, %c0_i32_0 : i32, i32
  }
  func.func @transform_3(%arg0: i32) -> (i32, i32, i32) {
    %c0_i32 = arith.constant 0 : i32
    %c0_i32_0 = arith.constant 0 : i32
    %c0_i32_1 = arith.constant 0 : i32
    return %arg0, %c0_i32, %c0_i32_0 : i32, i32, i32
  }
}

</mosaic_0001>

<llo_original>
// kernel: tpu_custom_call.1
$region0: #{tpu_custom_call.1}
  #allocation0 [shape = 'u32[]', space=smem, size = 0x4, offset = 0x4, fixed_abs, tag = 'smem constant byte address 0x4 - core index']
  #allocation1 [shape = 'u32[144,128]{1,0:T(1,128)}', space=vmem, size = 0x12000, scoped, tag = 'internal scratch']
  %s0 = inlined_call_operand.vmem [shape: f32[2,18,18,4], index: 0, kind: input, shape index: {}]
  %s1 = inlined_call_operand.vmem [shape: f32[40,128], index: 1, kind: input, shape index: {}]
  %s2 = inlined_call_operand.vmem [shape: f32[1,128], index: 2, kind: input, shape index: {}]
  %s3 = inlined_call_operand.hbm [shape: f32[2,1,128], index: 3, kind: output, shape index: {}]
  %s4 = sld [smem:[#allocation0]]
  $region45: #{tpu_custom_call.1} parent=0
    _
  %s6 = ssub.s32 1, %s4
  %s7 = scalar_select 0, %s6, %s4
  $region1: #{tpu_custom_call.1} parent=0
    #allocation2 [shape = 'u8[1024]{0}', space=vmem, size = 0x400, scoped, tag = 'output window, operand 0']
    #allocation3 [shape = 's32[2]{0}', space=sflag, size = 0x8, scoped, tag = 'scoped memory for tpu_custom_call.1']
    %8 = vsyncpa [#allocation3], 0
    %s9 = scalar_lea.sflag [#allocation3], 1
    %10 = vsyncpa %s9, 0
    loop: start=0, step=1, limit=4
    $region2: #{tpu_custom_call.1} parent=1 // loop_pre_header
      _
    $region3: #{tpu_custom_call.1} parent=1 // loop_header
      %s12 = sphi 0, %s16
      %p13 = scmp.ge.s32.totalorder %s12, 4
      %s22 = sphi 0, %s24
      %s25 = sphi 0, %s22
      %s26 = sphi 0, %s25
      %s42 = sphi 0, %s26
      %s46 = sphi 0, %s46
      %s48 = sphi 0, %s46
      %s49 = sphi 0, %s48
      %s63 = sphi 0, %s49
      %s67 = sphi 0, %s67
      %s69 = sphi 0, %s67
      %s70 = sphi 0, %s69
      %s84 = sphi 0, %s70
      %s90 = sphi 0, %s92
      %s93 = sphi 0, %s90
      %s94 = sphi 0, %s93
      %s110 = sphi 0, %s94
    $region4: #{tpu_custom_call.1} parent=1 // loop_header_branch
      %15 = sbr.rel (%p13) target = $region8
    $region5: #{tpu_custom_call.1} parent=1 // loop_body
      %s17 = ssub.s32 %s12, 1
      %s18 = ssub.s32 %s12, 2
      %s19 = sadd.s32 %s12, 1
      %s20 = ssub.s32 %s12, %s19
      %p21 = scmp.eq.s32.totalorder %s20, 0
      %s23 = sadd.s32 %s22, 1
      %s24 = scalar_select %p21, %s22, %s23
      %p27 = pneg %p21
      %p28 = scmp.eq.s32.totalorder %s12, 1
      %p29 = por %p27, %p28
      %p30 = scmp.ne.s32.totalorder %s22, %s25
      %p31 = scmp.eq.s32.totalorder %s12, 0
      %p32 = por %p30, %p31
      %p33 = scmp.ne.s32.totalorder %s22, %s25
      %p34 = scmp.eq.s32.totalorder %s17, 1
      %p35 = por %p33, %p34
      %p36 = scmp.ne.s32.totalorder %s25, %s26
      %p37 = scmp.eq.s32.totalorder %s17, 0
      %p38 = por %p36, %p37
      %p39 = scmp.ne.s32.totalorder %s25, %s26
      %p40 = scmp.eq.s32.totalorder %s18, 1
      %p41 = por %p39, %p40
      %p43 = scmp.ne.s32.totalorder %s26, %s42
      %p44 = scmp.eq.s32.totalorder %s18, 0
      %p45 = por %p43, %p44
      %s47 = sadd.s32 %s46, 1
      %p50 = scmp.eq.s32.totalorder %s12, 1
      %p51 = scmp.ne.s32.totalorder %s46, %s48
      %p52 = scmp.eq.s32.totalorder %s12, 0
      %p53 = por %p51, %p52
      %p54 = scmp.ne.s32.totalorder %s46, %s48
      %p55 = scmp.eq.s32.totalorder %s17, 1
      %p56 = por %p54, %p55
      %p57 = scmp.ne.s32.totalorder %s48, %s49
      %p58 = scmp.eq.s32.totalorder %s17, 0
      %p59 = por %p57, %p58
      %p60 = scmp.ne.s32.totalorder %s48, %s49
      %p61 = scmp.eq.s32.totalorder %s18, 1
      %p62 = por %p60, %p61
      %p64 = scmp.ne.s32.totalorder %s49, %s63
      %p65 = scmp.eq.s32.totalorder %s18, 0
      %p66 = por %p64, %p65
      %s68 = sadd.s32 %s67, 1
      %p71 = scmp.eq.s32.totalorder %s12, 1
      %p72 = scmp.ne.s32.totalorder %s67, %s69
      %p73 = scmp.eq.s32.totalorder %s12, 0
      %p74 = por %p72, %p73
      %p75 = scmp.ne.s32.totalorder %s67, %s69
      %p76 = scmp.eq.s32.totalorder %s17, 1
      %p77 = por %p75, %p76
      %p78 = scmp.ne.s32.totalorder %s69, %s70
      %p79 = scmp.eq.s32.totalorder %s17, 0
      %p80 = por %p78, %p79
      %p81 = scmp.ne.s32.totalorder %s69, %s70
      %p82 = scmp.eq.s32.totalorder %s18, 1
      %p83 = por %p81, %p82
      %p85 = scmp.ne.s32.totalorder %s70, %s84
      %p86 = scmp.eq.s32.totalorder %s18, 0
      %p87 = por %p85, %p86
      %s88 = ssub.s32 %s12, %s19
      %p89 = scmp.eq.s32.totalorder %s88, 0
      %s91 = sadd.s32 %s90, 1
      %s92 = scalar_select %p89, %s90, %s91
      %p95 = pneg %p89
      %p96 = scmp.eq.s32.totalorder %s12, 1
      %p97 = por %p95, %p96
      %p98 = scmp.ne.s32.totalorder %s90, %s93
      %p99 = scmp.eq.s32.totalorder %s12, 0
      %p100 = por %p98, %p99
      %p101 = scmp.ne.s32.totalorder %s90, %s93
      %p102 = scmp.eq.s32.totalorder %s17, 1
      %p103 = por %p101, %p102
      %p104 = scmp.ne.s32.totalorder %s93, %s94
      %p105 = scmp.eq.s32.totalorder %s17, 0
      %p106 = por %p104, %p105
      %p107 = scmp.ne.s32.totalorder %s93, %s94
      %p108 = scmp.eq.s32.totalorder %s18, 1
      %p109 = por %p107, %p108
      %p111 = scmp.ne.s32.totalorder %s94, %s110
      %p112 = scmp.eq.s32.totalorder %s18, 0
      %p113 = por %p111, %p112
      %p114 = scmp.le.s32.totalorder 1, %s12
      %p115 = scmp.lt.s32.totalorder %s12, 3
      %p116 = pnand %p114, %p115
      %p117 = pneg %p116
      // Predicated region
      $region9: #{tpu_custom_call.1} parent=5 // pred_check
        _
      $region10: #{tpu_custom_call.1} parent=5 // pred_check_branch
        %119 = sbr.rel (%p116) target = $region12
      $region11: #{tpu_custom_call.1} parent=5 // pred_region
        %s120 = ssub.s32 %s12, 1
        // Predicated region
        $region13: #{tpu_custom_call.1} parent=11 // pred_check
          %p121 = pneg %p59
        $region14: #{tpu_custom_call.1} parent=11 // pred_check_branch
          %123 = sbr.rel (%p121) target = $region16
        $region15: #{tpu_custom_call.1} parent=11 // pred_region
          _
        $region16: #{tpu_custom_call.1} parent=11 // pred_fallthru
          _
        // Predicated region
        $region17: #{tpu_custom_call.1} parent=11 // pred_check
          %p124 = pneg %p80
        $region18: #{tpu_custom_call.1} parent=11 // pred_check_branch
          %126 = sbr.rel (%p124) target = $region20
        $region19: #{tpu_custom_call.1} parent=11 // pred_region
          _
        $region20: #{tpu_custom_call.1} parent=11 // pred_fallthru
          _
      $region12: #{tpu_custom_call.1} parent=5 // pred_fallthru
        _
      %p127 = scmp.lt.s32.totalorder %s12, 2
      // Predicated region
      $region21: #{tpu_custom_call.1} parent=5 // pred_check
        %p128 = pneg %p127
      $region22: #{tpu_custom_call.1} parent=5 // pred_check_branch
        %130 = sbr.rel (%p128) target = $region24
      $region23: #{tpu_custom_call.1} parent=5 // pred_region
        // Predicated region
        $region25: #{tpu_custom_call.1} parent=23 // pred_check
          %p131 = pneg %p32
        $region26: #{tpu_custom_call.1} parent=23 // pred_check_branch
          %133 = sbr.rel (%p131) target = $region28
        $region27: #{tpu_custom_call.1} parent=23 // pred_region
          %p134 = scmp.lt.s32.totalorder %s12, 1
          %s135 = scalar_select %p134, %s12, 1
          %s136 = smul.addr %s135, 54
          %s137 = smul.addr %s136, 8
          %s138 = scalar_lea.vmem %s0, %s137
        $region28: #{tpu_custom_call.1} parent=23 // pred_fallthru
          _
      $region24: #{tpu_custom_call.1} parent=5 // pred_fallthru
        _
      %p139 = scmp.le.s32.totalorder 1, %s12
      %p140 = scmp.lt.s32.totalorder %s12, 3
      %p141 = pnand %p139, %p140
      %p142 = pneg %p141
      // Predicated region
      $region29: #{tpu_custom_call.1} parent=5 // pred_check
        _
      $region30: #{tpu_custom_call.1} parent=5 // pred_check_branch
        %144 = sbr.rel (%p141) target = $region32
      $region31: #{tpu_custom_call.1} parent=5 // pred_region
        %s145 = ssub.s32 %s12, 1
        %p146 = scmp.lt.s32.totalorder %s17, 1
        %s147 = scalar_select %p146, %s17, 1
        %s148 = smul.addr %s147, 54
        %s149 = smul.addr %s148, 8
        %s150 = scalar_lea.vmem %s0, %s149
        %p151 = pneg %p38
        %p152 = pneg %p35
        %p153 = pneg %p59
        %p154 = pneg %p56
        %p155 = pneg %p80
        %p156 = pneg %p77
        %p157 = pneg %p106
        %p158 = pneg %p103
        %s159 = sand.u32 %s93, 1
        %s160 = scalar_lea.sflag [#allocation3], %s159
        %s161 = sand.u32 %s93, 1
        %s162 = scalar_lea.vmem [#allocation2], %s161
        %p163 = scmp.lt.s32.totalorder %s17, 1
        %s164 = scalar_select %p163, %s17, 1
        %s165 = smul.addr %s164, 54
        %s166 = smul.addr %s165, 8
        %s167 = scalar_lea.vmem %s0, %s166
        %v168 = vld [vmem:[%s167] sm:$0xff]
        %v169 = vld [vmem:[%s167 + $0x8] sm:$0xff]
        %v170 = vld [vmem:[%s167 + $0x10] sm:$0x3]
        %v171 = vld [vmem:[%s167 + $0x18] sm:$0xff]
        %v172 = vld [vmem:[%s167 + $0x20] sm:$0xff]
        %v173 = vld [vmem:[%s167 + $0x28] sm:$0x3]
        %v174 = vld [vmem:[%s167 + $0x30] sm:$0xff]
        %v175 = vld [vmem:[%s167 + $0x38] sm:$0xff]
        %v176 = vld [vmem:[%s167 + $0x40] sm:$0x3]
        %v177 = vld [vmem:[%s167 + $0x48] sm:$0xff]
        %v178 = vld [vmem:[%s167 + $0x50] sm:$0xff]
        %v179 = vld [vmem:[%s167 + $0x58] sm:$0x3]
        %v180 = vld [vmem:[%s167 + $0x60] sm:$0xff]
        %v181 = vld [vmem:[%s167 + $0x68] sm:$0xff]
        %v182 = vld [vmem:[%s167 + $0x70] sm:$0x3]
        %v183 = vld [vmem:[%s167 + $0x78] sm:$0xff]
        %v184 = vld [vmem:[%s167 + $0x80] sm:$0xff]
        %v185 = vld [vmem:[%s167 + $0x88] sm:$0x3]
        %v186 = vld [vmem:[%s167 + $0x90] sm:$0xff]
        %v187 = vld [vmem:[%s167 + $0x98] sm:$0xff]
        %v188 = vld [vmem:[%s167 + $0xa0] sm:$0x3]
        %v189 = vld [vmem:[%s167 + $0xa8] sm:$0xff]
        %v190 = vld [vmem:[%s167 + $0xb0] sm:$0xff]
        %v191 = vld [vmem:[%s167 + $0xb8] sm:$0x3]
        %v192 = vld [vmem:[%s167 + $0xc0] sm:$0xff]
        %v193 = vld [vmem:[%s167 + $0xc8] sm:$0xff]
        %v194 = vld [vmem:[%s167 + $0xd0] sm:$0x3]
        %v195 = vld [vmem:[%s167 + $0xd8] sm:$0xff]
        %v196 = vld [vmem:[%s167 + $0xe0] sm:$0xff]
        %v197 = vld [vmem:[%s167 + $0xe8] sm:$0x3]
        %v198 = vld [vmem:[%s167 + $0xf0] sm:$0xff]
        %v199 = vld [vmem:[%s167 + $0xf8] sm:$0xff]
        %v200 = vld [vmem:[%s167 + $0x100] sm:$0x3]
        %v201 = vld [vmem:[%s167 + $0x108] sm:$0xff]
        %v202 = vld [vmem:[%s167 + $0x110] sm:$0xff]
        %v203 = vld [vmem:[%s167 + $0x118] sm:$0x3]
        %v204 = vld [vmem:[%s167 + $0x120] sm:$0xff]
        %v205 = vld [vmem:[%s167 + $0x128] sm:$0xff]
        %v206 = vld [vmem:[%s167 + $0x130] sm:$0x3]
        %v207 = vld [vmem:[%s167 + $0x138] sm:$0xff]
        %v208 = vld [vmem:[%s167 + $0x140] sm:$0xff]
        %v209 = vld [vmem:[%s167 + $0x148] sm:$0x3]
        %v210 = vld [vmem:[%s167 + $0x150] sm:$0xff]
        %v211 = vld [vmem:[%s167 + $0x158] sm:$0xff]
        %v212 = vld [vmem:[%s167 + $0x160] sm:$0x3]
        %v213 = vld [vmem:[%s167 + $0x168] sm:$0xff]
        %v214 = vld [vmem:[%s167 + $0x170] sm:$0xff]
        %v215 = vld [vmem:[%s167 + $0x178] sm:$0x3]
        %v216 = vld [vmem:[%s167 + $0x180] sm:$0xff]
        %v217 = vld [vmem:[%s167 + $0x188] sm:$0xff]
        %v218 = vld [vmem:[%s167 + $0x190] sm:$0x3]
        %v219 = vld [vmem:[%s167 + $0x198] sm:$0xff]
        %v220 = vld [vmem:[%s167 + $0x1a0] sm:$0xff]
        %v221 = vld [vmem:[%s167 + $0x1a8] sm:$0x3]
        %vm270 = vcmask 1046528
        %v271 = vrot.slane %v168, 1
        %v272 = vrot.slane %v169, 1
        %v273 = vsel %vm270, %v271, %v272
        %v274 = vrot.slane %v170, 1
        %v275 = vsel %vm270, %v272, %v274
        %v276 = vrot.slane %v171, 1
        %v277 = vrot.slane %v172, 1
        %v278 = vsel %vm270, %v276, %v277
        %v279 = vrot.slane %v173, 1
        %v280 = vsel %vm270, %v277, %v279
        %v281 = vrot.slane %v174, 1
        %v282 = vrot.slane %v175, 1
        %v283 = vsel %vm270, %v281, %v282
        %v284 = vrot.slane %v176, 1
        %v285 = vsel %vm270, %v282, %v284
        %v286 = vrot.slane %v177, 1
        %v287 = vrot.slane %v178, 1
        %v288 = vsel %vm270, %v286, %v287
        %v289 = vrot.slane %v179, 1
        %v290 = vsel %vm270, %v287, %v289
        %v291 = vrot.slane %v180, 1
        %v292 = vrot.slane %v181, 1
        %v293 = vsel %vm270, %v291, %v292
        %v294 = vrot.slane %v182, 1
        %v295 = vsel %vm270, %v292, %v294
        %v296 = vrot.slane %v183, 1
        %v297 = vrot.slane %v184, 1
        %v298 = vsel %vm270, %v296, %v297
        %v299 = vrot.slane %v185, 1
        %v300 = vsel %vm270, %v297, %v299
        %v301 = vrot.slane %v186, 1
        %v302 = vrot.slane %v187, 1
        %v303 = vsel %vm270, %v301, %v302
        %v304 = vrot.slane %v188, 1
        %v305 = vsel %vm270, %v302, %v304
        %v306 = vrot.slane %v189, 1
        %v307 = vrot.slane %v190, 1
        %v308 = vsel %vm270, %v306, %v307
        %v309 = vrot.slane %v191, 1
        %v310 = vsel %vm270, %v307, %v309
        %v311 = vrot.slane %v192, 1
        %v312 = vrot.slane %v193, 1
        %v313 = vsel %vm270, %v311, %v312
        %v314 = vrot.slane %v194, 1
        %v315 = vsel %vm270, %v312, %v314
        %v316 = vrot.slane %v195, 1
        %v317 = vrot.slane %v196, 1
        %v318 = vsel %vm270, %v316, %v317
        %v319 = vrot.slane %v197, 1
        %v320 = vsel %vm270, %v317, %v319
        %v321 = vrot.slane %v198, 1
        %v322 = vrot.slane %v199, 1
        %v323 = vsel %vm270, %v321, %v322
        %v324 = vrot.slane %v200, 1
        %v325 = vsel %vm270, %v322, %v324
        %v326 = vrot.slane %v201, 1
        %v327 = vrot.slane %v202, 1
        %v328 = vsel %vm270, %v326, %v327
        %v329 = vrot.slane %v203, 1
        %v330 = vsel %vm270, %v327, %v329
        %v331 = vrot.slane %v204, 1
        %v332 = vrot.slane %v205, 1
        %v333 = vsel %vm270, %v331, %v332
        %v334 = vrot.slane %v206, 1
        %v335 = vsel %vm270, %v332, %v334
        %v336 = vrot.slane %v207, 1
        %v337 = vrot.slane %v208, 1
        %v338 = vsel %vm270, %v336, %v337
        %v339 = vrot.slane %v209, 1
        %v340 = vsel %vm270, %v337, %v339
        %v341 = vrot.slane %v210, 1
        %v342 = vrot.slane %v211, 1
        %v343 = vsel %vm270, %v341, %v342
        %v344 = vrot.slane %v212, 1
        %v345 = vsel %vm270, %v342, %v344
        %v346 = vrot.slane %v213, 1
        %v347 = vrot.slane %v214, 1
        %v348 = vsel %vm270, %v346, %v347
        %v349 = vrot.slane %v215, 1
        %v350 = vsel %vm270, %v347, %v349
        %vm351 = vcmask 1045504
        %v352 = vrot.slane %v168, 2
        %v353 = vrot.slane %v169, 2
        %v354 = vsel %vm351, %v352, %v353
        %v355 = vrot.slane %v170, 2
        %v356 = vsel %vm351, %v353, %v355
        %v357 = vrot.slane %v171, 2
        %v358 = vrot.slane %v172, 2
        %v359 = vsel %vm351, %v357, %v358
        %v360 = vrot.slane %v173, 2
        %v361 = vsel %vm351, %v358, %v360
        %v362 = vrot.slane %v174, 2
        %v363 = vrot.slane %v175, 2
        %v364 = vsel %vm351, %v362, %v363
        %v365 = vrot.slane %v176, 2
        %v366 = vsel %vm351, %v363, %v365
        %v367 = vrot.slane %v177, 2
        %v368 = vrot.slane %v178, 2
        %v369 = vsel %vm351, %v367, %v368
        %v370 = vrot.slane %v179, 2
        %v371 = vsel %vm351, %v368, %v370
        %v372 = vrot.slane %v180, 2
        %v373 = vrot.slane %v181, 2
        %v374 = vsel %vm351, %v372, %v373
        %v375 = vrot.slane %v182, 2
        %v376 = vsel %vm351, %v373, %v375
        %v377 = vrot.slane %v183, 2
        %v378 = vrot.slane %v184, 2
        %v379 = vsel %vm351, %v377, %v378
        %v380 = vrot.slane %v185, 2
        %v381 = vsel %vm351, %v378, %v380
        %v382 = vrot.slane %v186, 2
        %v383 = vrot.slane %v187, 2
        %v384 = vsel %vm351, %v382, %v383
        %v385 = vrot.slane %v188, 2
        %v386 = vsel %vm351, %v383, %v385
        %v387 = vrot.slane %v189, 2
        %v388 = vrot.slane %v190, 2
        %v389 = vsel %vm351, %v387, %v388
        %v390 = vrot.slane %v191, 2
        %v391 = vsel %vm351, %v388, %v390
        %v392 = vrot.slane %v192, 2
        %v393 = vrot.slane %v193, 2
        %v394 = vsel %vm351, %v392, %v393
        %v395 = vrot.slane %v194, 2
        %v396 = vsel %vm351, %v393, %v395
        %v397 = vrot.slane %v195, 2
        %v398 = vrot.slane %v196, 2
        %v399 = vsel %vm351, %v397, %v398
        %v400 = vrot.slane %v197, 2
        %v401 = vsel %vm351, %v398, %v400
        %v402 = vrot.slane %v198, 2
        %v403 = vrot.slane %v199, 2
        %v404 = vsel %vm351, %v402, %v403
        %v405 = vrot.slane %v200, 2
        %v406 = vsel %vm351, %v403, %v405
        %v407 = vrot.slane %v201, 2
        %v408 = vrot.slane %v202, 2
        %v409 = vsel %vm351, %v407, %v408
        %v410 = vrot.slane %v203, 2
        %v411 = vsel %vm351, %v408, %v410
        %v412 = vrot.slane %v204, 2
        %v413 = vrot.slane %v205, 2
        %v414 = vsel %vm351, %v412, %v413
        %v415 = vrot.slane %v206, 2
        %v416 = vsel %vm351, %v413, %v415
        %v417 = vrot.slane %v207, 2
        %v418 = vrot.slane %v208, 2
        %v419 = vsel %vm351, %v417, %v418
        %v420 = vrot.slane %v209, 2
        %v421 = vsel %vm351, %v418, %v420
        %v422 = vrot.slane %v210, 2
        %v423 = vrot.slane %v211, 2
        %v424 = vsel %vm351, %v422, %v423
        %v425 = vrot.slane %v212, 2
        %v426 = vsel %vm351, %v423, %v425
        %v427 = vrot.slane %v213, 2
        %v428 = vrot.slane %v214, 2
        %v429 = vsel %vm351, %v427, %v428
        %v430 = vrot.slane %v215, 2
        %v431 = vsel %vm351, %v428, %v430
        %v435 = vrot.slane %v216, 1
        %v436 = vrot.slane %v217, 1
        %v437 = vsel %vm270, %v435, %v436
        %v438 = vrot.slane %v218, 1
        %v439 = vsel %vm270, %v436, %v438
        %v440 = vrot.slane %v216, 2
        %v441 = vrot.slane %v217, 2
        %v442 = vsel %vm351, %v440, %v441
        %v443 = vrot.slane %v218, 2
        %v444 = vsel %vm351, %v441, %v443
        %v448 = vrot.slane %v219, 1
        %v449 = vrot.slane %v220, 1
        %v450 = vsel %vm270, %v448, %v449
        %v451 = vrot.slane %v221, 1
        %v452 = vsel %vm270, %v449, %v451
        %v453 = vrot.slane %v219, 2
        %v454 = vrot.slane %v220, 2
        %v455 = vsel %vm351, %v453, %v454
        %v456 = vrot.slane %v221, 2
        %v457 = vsel %vm351, %v454, %v456
        %458 = vrot.lane.b32.xlu0 %v273, 4
        %v459 = vpop.permute.xlu0 %458
        %460 = vrot.lane.b32.xlu0 %v275, 4
        %v461 = vpop.permute.xlu0 %460
        %462 = vrot.lane.b32.xlu0 %v278, 4
        %v463 = vpop.permute.xlu0 %462
        %464 = vrot.lane.b32.xlu0 %v280, 4
        %v465 = vpop.permute.xlu0 %464
        %466 = vrot.lane.b32.xlu0 %v283, 4
        %v467 = vpop.permute.xlu0 %466
        %468 = vrot.lane.b32.xlu0 %v285, 4
        %v469 = vpop.permute.xlu0 %468
        %470 = vrot.lane.b32.xlu0 %v288, 4
        %v471 = vpop.permute.xlu0 %470
        %472 = vrot.lane.b32.xlu0 %v290, 4
        %v473 = vpop.permute.xlu0 %472
        %474 = vrot.lane.b32.xlu0 %v293, 4
        %v475 = vpop.permute.xlu0 %474
        %476 = vrot.lane.b32.xlu0 %v295, 4
        %v477 = vpop.permute.xlu0 %476
        %478 = vrot.lane.b32.xlu0 %v298, 4
        %v479 = vpop.permute.xlu0 %478
        %480 = vrot.lane.b32.xlu0 %v300, 4
        %v481 = vpop.permute.xlu0 %480
        %482 = vrot.lane.b32.xlu0 %v303, 4
        %v483 = vpop.permute.xlu0 %482
        %484 = vrot.lane.b32.xlu0 %v305, 4
        %v485 = vpop.permute.xlu0 %484
        %486 = vrot.lane.b32.xlu0 %v308, 4
        %v487 = vpop.permute.xlu0 %486
        %488 = vrot.lane.b32.xlu0 %v310, 4
        %v489 = vpop.permute.xlu0 %488
        %490 = vrot.lane.b32.xlu0 %v313, 4
        %v491 = vpop.permute.xlu0 %490
        %492 = vrot.lane.b32.xlu0 %v315, 4
        %v493 = vpop.permute.xlu0 %492
        %494 = vrot.lane.b32.xlu0 %v318, 4
        %v495 = vpop.permute.xlu0 %494
        %496 = vrot.lane.b32.xlu0 %v320, 4
        %v497 = vpop.permute.xlu0 %496
        %498 = vrot.lane.b32.xlu0 %v323, 4
        %v499 = vpop.permute.xlu0 %498
        %500 = vrot.lane.b32.xlu0 %v325, 4
        %v501 = vpop.permute.xlu0 %500
        %502 = vrot.lane.b32.xlu0 %v328, 4
        %v503 = vpop.permute.xlu0 %502
        %504 = vrot.lane.b32.xlu0 %v330, 4
        %v505 = vpop.permute.xlu0 %504
        %506 = vrot.lane.b32.xlu0 %v333, 4
        %v507 = vpop.permute.xlu0 %506
        %508 = vrot.lane.b32.xlu0 %v335, 4
        %v509 = vpop.permute.xlu0 %508
        %510 = vrot.lane.b32.xlu0 %v338, 4
        %v511 = vpop.permute.xlu0 %510
        %512 = vrot.lane.b32.xlu0 %v340, 4
        %v513 = vpop.permute.xlu0 %512
        %514 = vrot.lane.b32.xlu0 %v343, 4
        %v515 = vpop.permute.xlu0 %514
        %516 = vrot.lane.b32.xlu0 %v345, 4
        %v517 = vpop.permute.xlu0 %516
        %518 = vrot.lane.b32.xlu0 %v348, 4
        %v519 = vpop.permute.xlu0 %518
        %520 = vrot.lane.b32.xlu0 %v350, 4
        %v521 = vpop.permute.xlu0 %520
        %554 = vrot.lane.b32.xlu0 %v354, 8
        %v555 = vpop.permute.xlu0 %554
        %556 = vrot.lane.b32.xlu0 %v356, 8
        %v557 = vpop.permute.xlu0 %556
        %558 = vrot.lane.b32.xlu0 %v359, 8
        %v559 = vpop.permute.xlu0 %558
        %560 = vrot.lane.b32.xlu0 %v361, 8
        %v561 = vpop.permute.xlu0 %560
        %562 = vrot.lane.b32.xlu0 %v364, 8
        %v563 = vpop.permute.xlu0 %562
        %564 = vrot.lane.b32.xlu0 %v366, 8
        %v565 = vpop.permute.xlu0 %564
        %566 = vrot.lane.b32.xlu0 %v369, 8
        %v567 = vpop.permute.xlu0 %566
        %568 = vrot.lane.b32.xlu0 %v371, 8
        %v569 = vpop.permute.xlu0 %568
        %570 = vrot.lane.b32.xlu0 %v374, 8
        %v571 = vpop.permute.xlu0 %570
        %572 = vrot.lane.b32.xlu0 %v376, 8
        %v573 = vpop.permute.xlu0 %572
        %574 = vrot.lane.b32.xlu0 %v379, 8
        %v575 = vpop.permute.xlu0 %574
        %576 = vrot.lane.b32.xlu0 %v381, 8
        %v577 = vpop.permute.xlu0 %576
        %578 = vrot.lane.b32.xlu0 %v384, 8
        %v579 = vpop.permute.xlu0 %578
        %580 = vrot.lane.b32.xlu0 %v386, 8
        %v581 = vpop.permute.xlu0 %580
        %582 = vrot.lane.b32.xlu0 %v389, 8
        %v583 = vpop.permute.xlu0 %582
        %584 = vrot.lane.b32.xlu0 %v391, 8
        %v585 = vpop.permute.xlu0 %584
        %586 = vrot.lane.b32.xlu0 %v394, 8
        %v587 = vpop.permute.xlu0 %586
        %588 = vrot.lane.b32.xlu0 %v396, 8
        %v589 = vpop.permute.xlu0 %588
        %590 = vrot.lane.b32.xlu0 %v399, 8
        %v591 = vpop.permute.xlu0 %590
        %592 = vrot.lane.b32.xlu0 %v401, 8
        %v593 = vpop.permute.xlu0 %592
        %594 = vrot.lane.b32.xlu0 %v404, 8
        %v595 = vpop.permute.xlu0 %594
        %596 = vrot.lane.b32.xlu0 %v406, 8
        %v597 = vpop.permute.xlu0 %596
        %598 = vrot.lane.b32.xlu0 %v409, 8
        %v599 = vpop.permute.xlu0 %598
        %600 = vrot.lane.b32.xlu0 %v411, 8
        %v601 = vpop.permute.xlu0 %600
        %602 = vrot.lane.b32.xlu0 %v414, 8
        %v603 = vpop.permute.xlu0 %602
        %604 = vrot.lane.b32.xlu0 %v416, 8
        %v605 = vpop.permute.xlu0 %604
        %606 = vrot.lane.b32.xlu0 %v419, 8
        %v607 = vpop.permute.xlu0 %606
        %608 = vrot.lane.b32.xlu0 %v421, 8
        %v609 = vpop.permute.xlu0 %608
        %610 = vrot.lane.b32.xlu0 %v424, 8
        %v611 = vpop.permute.xlu0 %610
        %612 = vrot.lane.b32.xlu0 %v426, 8
        %v613 = vpop.permute.xlu0 %612
        %614 = vrot.lane.b32.xlu0 %v429, 8
        %v615 = vpop.permute.xlu0 %614
        %616 = vrot.lane.b32.xlu0 %v431, 8
        %v617 = vpop.permute.xlu0 %616
        %650 = vrot.lane.b32.xlu0 %v171, 12
        %v651 = vpop.permute.xlu0 %650
        %652 = vrot.lane.b32.xlu0 %v172, 12
        %v653 = vpop.permute.xlu0 %652
        %654 = vrot.lane.b32.xlu0 %v174, 12
        %v655 = vpop.permute.xlu0 %654
        %656 = vrot.lane.b32.xlu0 %v175, 12
        %v657 = vpop.permute.xlu0 %656
        %658 = vrot.lane.b32.xlu0 %v177, 12
        %v659 = vpop.permute.xlu0 %658
        %660 = vrot.lane.b32.xlu0 %v178, 12
        %v661 = vpop.permute.xlu0 %660
        %662 = vrot.lane.b32.xlu0 %v180, 12
        %v663 = vpop.permute.xlu0 %662
        %664 = vrot.lane.b32.xlu0 %v181, 12
        %v665 = vpop.permute.xlu0 %664
        %666 = vrot.lane.b32.xlu0 %v183, 12
        %v667 = vpop.permute.xlu0 %666
        %668 = vrot.lane.b32.xlu0 %v184, 12
        %v669 = vpop.permute.xlu0 %668
        %670 = vrot.lane.b32.xlu0 %v186, 12
        %v671 = vpop.permute.xlu0 %670
        %672 = vrot.lane.b32.xlu0 %v187, 12
        %v673 = vpop.permute.xlu0 %672
        %674 = vrot.lane.b32.xlu0 %v189, 12
        %v675 = vpop.permute.xlu0 %674
        %676 = vrot.lane.b32.xlu0 %v190, 12
        %v677 = vpop.permute.xlu0 %676
        %678 = vrot.lane.b32.xlu0 %v192, 12
        %v679 = vpop.permute.xlu0 %678
        %680 = vrot.lane.b32.xlu0 %v193, 12
        %v681 = vpop.permute.xlu0 %680
        %682 = vrot.lane.b32.xlu0 %v195, 12
        %v683 = vpop.permute.xlu0 %682
        %684 = vrot.lane.b32.xlu0 %v196, 12
        %v685 = vpop.permute.xlu0 %684
        %686 = vrot.lane.b32.xlu0 %v198, 12
        %v687 = vpop.permute.xlu0 %686
        %688 = vrot.lane.b32.xlu0 %v199, 12
        %v689 = vpop.permute.xlu0 %688
        %690 = vrot.lane.b32.xlu0 %v201, 12
        %v691 = vpop.permute.xlu0 %690
        %692 = vrot.lane.b32.xlu0 %v202, 12
        %v693 = vpop.permute.xlu0 %692
        %694 = vrot.lane.b32.xlu0 %v204, 12
        %v695 = vpop.permute.xlu0 %694
        %696 = vrot.lane.b32.xlu0 %v205, 12
        %v697 = vpop.permute.xlu0 %696
        %698 = vrot.lane.b32.xlu0 %v207, 12
        %v699 = vpop.permute.xlu0 %698
        %700 = vrot.lane.b32.xlu0 %v208, 12
        %v701 = vpop.permute.xlu0 %700
        %702 = vrot.lane.b32.xlu0 %v210, 12
        %v703 = vpop.permute.xlu0 %702
        %704 = vrot.lane.b32.xlu0 %v211, 12
        %v705 = vpop.permute.xlu0 %704
        %706 = vrot.lane.b32.xlu0 %v213, 12
        %v707 = vpop.permute.xlu0 %706
        %708 = vrot.lane.b32.xlu0 %v214, 12
        %v709 = vpop.permute.xlu0 %708
        %710 = vrot.lane.b32.xlu0 %v216, 12
        %v711 = vpop.permute.xlu0 %710
        %712 = vrot.lane.b32.xlu0 %v217, 12
        %v713 = vpop.permute.xlu0 %712
        %746 = vrot.lane.b32.xlu0 %v278, 16
        %v747 = vpop.permute.xlu0 %746
        %748 = vrot.lane.b32.xlu0 %v280, 16
        %v749 = vpop.permute.xlu0 %748
        %750 = vrot.lane.b32.xlu0 %v283, 16
        %v751 = vpop.permute.xlu0 %750
        %752 = vrot.lane.b32.xlu0 %v285, 16
        %v753 = vpop.permute.xlu0 %752
        %754 = vrot.lane.b32.xlu0 %v288, 16
        %v755 = vpop.permute.xlu0 %754
        %756 = vrot.lane.b32.xlu0 %v290, 16
        %v757 = vpop.permute.xlu0 %756
        %758 = vrot.lane.b32.xlu0 %v293, 16
        %v759 = vpop.permute.xlu0 %758
        %760 = vrot.lane.b32.xlu0 %v295, 16
        %v761 = vpop.permute.xlu0 %760
        %762 = vrot.lane.b32.xlu0 %v298, 16
        %v763 = vpop.permute.xlu0 %762
        %764 = vrot.lane.b32.xlu0 %v300, 16
        %v765 = vpop.permute.xlu0 %764
        %766 = vrot.lane.b32.xlu0 %v303, 16
        %v767 = vpop.permute.xlu0 %766
        %768 = vrot.lane.b32.xlu0 %v305, 16
        %v769 = vpop.permute.xlu0 %768
        %770 = vrot.lane.b32.xlu0 %v308, 16
        %v771 = vpop.permute.xlu0 %770
        %772 = vrot.lane.b32.xlu0 %v310, 16
        %v773 = vpop.permute.xlu0 %772
        %774 = vrot.lane.b32.xlu0 %v313, 16
        %v775 = vpop.permute.xlu0 %774
        %776 = vrot.lane.b32.xlu0 %v315, 16
        %v777 = vpop.permute.xlu0 %776
        %778 = vrot.lane.b32.xlu0 %v318, 16
        %v779 = vpop.permute.xlu0 %778
        %780 = vrot.lane.b32.xlu0 %v320, 16
        %v781 = vpop.permute.xlu0 %780
        %782 = vrot.lane.b32.xlu0 %v323, 16
        %v783 = vpop.permute.xlu0 %782
        %784 = vrot.lane.b32.xlu0 %v325, 16
        %v785 = vpop.permute.xlu0 %784
        %786 = vrot.lane.b32.xlu0 %v328, 16
        %v787 = vpop.permute.xlu0 %786
        %788 = vrot.lane.b32.xlu0 %v330, 16
        %v789 = vpop.permute.xlu0 %788
        %790 = vrot.lane.b32.xlu0 %v333, 16
        %v791 = vpop.permute.xlu0 %790
        %792 = vrot.lane.b32.xlu0 %v335, 16
        %v793 = vpop.permute.xlu0 %792
        %794 = vrot.lane.b32.xlu0 %v338, 16
        %v795 = vpop.permute.xlu0 %794
        %796 = vrot.lane.b32.xlu0 %v340, 16
        %v797 = vpop.permute.xlu0 %796
        %798 = vrot.lane.b32.xlu0 %v343, 16
        %v799 = vpop.permute.xlu0 %798
        %800 = vrot.lane.b32.xlu0 %v345, 16
        %v801 = vpop.permute.xlu0 %800
        %802 = vrot.lane.b32.xlu0 %v348, 16
        %v803 = vpop.permute.xlu0 %802
        %804 = vrot.lane.b32.xlu0 %v350, 16
        %v805 = vpop.permute.xlu0 %804
        %806 = vrot.lane.b32.xlu0 %v437, 16
        %v807 = vpop.permute.xlu0 %806
        %808 = vrot.lane.b32.xlu0 %v439, 16
        %v809 = vpop.permute.xlu0 %808
        %842 = vrot.lane.b32.xlu0 %v359, 20
        %v843 = vpop.permute.xlu0 %842
        %844 = vrot.lane.b32.xlu0 %v361, 20
        %v845 = vpop.permute.xlu0 %844
        %846 = vrot.lane.b32.xlu0 %v364, 20
        %v847 = vpop.permute.xlu0 %846
        %848 = vrot.lane.b32.xlu0 %v366, 20
        %v849 = vpop.permute.xlu0 %848
        %850 = vrot.lane.b32.xlu0 %v369, 20
        %v851 = vpop.permute.xlu0 %850
        %852 = vrot.lane.b32.xlu0 %v371, 20
        %v853 = vpop.permute.xlu0 %852
        %854 = vrot.lane.b32.xlu0 %v374, 20
        %v855 = vpop.permute.xlu0 %854
        %856 = vrot.lane.b32.xlu0 %v376, 20
        %v857 = vpop.permute.xlu0 %856
        %858 = vrot.lane.b32.xlu0 %v379, 20
        %v859 = vpop.permute.xlu0 %858
        %860 = vrot.lane.b32.xlu0 %v381, 20
        %v861 = vpop.permute.xlu0 %860
        %862 = vrot.lane.b32.xlu0 %v384, 20
        %v863 = vpop.permute.xlu0 %862
        %864 = vrot.lane.b32.xlu0 %v386, 20
        %v865 = vpop.permute.xlu0 %864
        %866 = vrot.lane.b32.xlu0 %v389, 20
        %v867 = vpop.permute.xlu0 %866
        %868 = vrot.lane.b32.xlu0 %v391, 20
        %v869 = vpop.permute.xlu0 %868
        %870 = vrot.lane.b32.xlu0 %v394, 20
        %v871 = vpop.permute.xlu0 %870
        %872 = vrot.lane.b32.xlu0 %v396, 20
        %v873 = vpop.permute.xlu0 %872
        %874 = vrot.lane.b32.xlu0 %v399, 20
        %v875 = vpop.permute.xlu0 %874
        %876 = vrot.lane.b32.xlu0 %v401, 20
        %v877 = vpop.permute.xlu0 %876
        %878 = vrot.lane.b32.xlu0 %v404, 20
        %v879 = vpop.permute.xlu0 %878
        %880 = vrot.lane.b32.xlu0 %v406, 20
        %v881 = vpop.permute.xlu0 %880
        %882 = vrot.lane.b32.xlu0 %v409, 20
        %v883 = vpop.permute.xlu0 %882
        %884 = vrot.lane.b32.xlu0 %v411, 20
        %v885 = vpop.permute.xlu0 %884
        %886 = vrot.lane.b32.xlu0 %v414, 20
        %v887 = vpop.permute.xlu0 %886
        %888 = vrot.lane.b32.xlu0 %v416, 20
        %v889 = vpop.permute.xlu0 %888
        %890 = vrot.lane.b32.xlu0 %v419, 20
        %v891 = vpop.permute.xlu0 %890
        %892 = vrot.lane.b32.xlu0 %v421, 20
        %v893 = vpop.permute.xlu0 %892
        %894 = vrot.lane.b32.xlu0 %v424, 20
        %v895 = vpop.permute.xlu0 %894
        %896 = vrot.lane.b32.xlu0 %v426, 20
        %v897 = vpop.permute.xlu0 %896
        %898 = vrot.lane.b32.xlu0 %v429, 20
        %v899 = vpop.permute.xlu0 %898
        %900 = vrot.lane.b32.xlu0 %v431, 20
        %v901 = vpop.permute.xlu0 %900
        %902 = vrot.lane.b32.xlu0 %v442, 20
        %v903 = vpop.permute.xlu0 %902
        %904 = vrot.lane.b32.xlu0 %v444, 20
        %v905 = vpop.permute.xlu0 %904
        %938 = vrot.lane.b32.xlu0 %v174, 24
        %v939 = vpop.permute.xlu0 %938
        %940 = vrot.lane.b32.xlu0 %v175, 24
        %v941 = vpop.permute.xlu0 %940
        %942 = vrot.lane.b32.xlu0 %v177, 24
        %v943 = vpop.permute.xlu0 %942
        %944 = vrot.lane.b32.xlu0 %v178, 24
        %v945 = vpop.permute.xlu0 %944
        %946 = vrot.lane.b32.xlu0 %v180, 24
        %v947 = vpop.permute.xlu0 %946
        %948 = vrot.lane.b32.xlu0 %v181, 24
        %v949 = vpop.permute.xlu0 %948
        %950 = vrot.lane.b32.xlu0 %v183, 24
        %v951 = vpop.permute.xlu0 %950
        %952 = vrot.lane.b32.xlu0 %v184, 24
        %v953 = vpop.permute.xlu0 %952
        %954 = vrot.lane.b32.xlu0 %v186, 24
        %v955 = vpop.permute.xlu0 %954
        %956 = vrot.lane.b32.xlu0 %v187, 24
        %v957 = vpop.permute.xlu0 %956
        %958 = vrot.lane.b32.xlu0 %v189, 24
        %v959 = vpop.permute.xlu0 %958
        %960 = vrot.lane.b32.xlu0 %v190, 24
        %v961 = vpop.permute.xlu0 %960
        %962 = vrot.lane.b32.xlu0 %v192, 24
        %v963 = vpop.permute.xlu0 %962
        %964 = vrot.lane.b32.xlu0 %v193, 24
        %v965 = vpop.permute.xlu0 %964
        %966 = vrot.lane.b32.xlu0 %v195, 24
        %v967 = vpop.permute.xlu0 %966
        %968 = vrot.lane.b32.xlu0 %v196, 24
        %v969 = vpop.permute.xlu0 %968
        %970 = vrot.lane.b32.xlu0 %v198, 24
        %v971 = vpop.permute.xlu0 %970
        %972 = vrot.lane.b32.xlu0 %v199, 24
        %v973 = vpop.permute.xlu0 %972
        %974 = vrot.lane.b32.xlu0 %v201, 24
        %v975 = vpop.permute.xlu0 %974
        %976 = vrot.lane.b32.xlu0 %v202, 24
        %v977 = vpop.permute.xlu0 %976
        %978 = vrot.lane.b32.xlu0 %v204, 24
        %v979 = vpop.permute.xlu0 %978
        %980 = vrot.lane.b32.xlu0 %v205, 24
        %v981 = vpop.permute.xlu0 %980
        %982 = vrot.lane.b32.xlu0 %v207, 24
        %v983 = vpop.permute.xlu0 %982
        %984 = vrot.lane.b32.xlu0 %v208, 24
        %v985 = vpop.permute.xlu0 %984
        %986 = vrot.lane.b32.xlu0 %v210, 24
        %v987 = vpop.permute.xlu0 %986
        %988 = vrot.lane.b32.xlu0 %v211, 24
        %v989 = vpop.permute.xlu0 %988
        %990 = vrot.lane.b32.xlu0 %v213, 24
        %v991 = vpop.permute.xlu0 %990
        %992 = vrot.lane.b32.xlu0 %v214, 24
        %v993 = vpop.permute.xlu0 %992
        %994 = vrot.lane.b32.xlu0 %v216, 24
        %v995 = vpop.permute.xlu0 %994
        %996 = vrot.lane.b32.xlu0 %v217, 24
        %v997 = vpop.permute.xlu0 %996
        %998 = vrot.lane.b32.xlu0 %v219, 24
        %v999 = vpop.permute.xlu0 %998
        %1000 = vrot.lane.b32.xlu0 %v220, 24
        %v1001 = vpop.permute.xlu0 %1000
        %1034 = vrot.lane.b32.xlu0 %v283, 28
        %v1035 = vpop.permute.xlu0 %1034
        %1036 = vrot.lane.b32.xlu0 %v285, 28
        %v1037 = vpop.permute.xlu0 %1036
        %1038 = vrot.lane.b32.xlu0 %v288, 28
        %v1039 = vpop.permute.xlu0 %1038
        %1040 = vrot.lane.b32.xlu0 %v290, 28
        %v1041 = vpop.permute.xlu0 %1040
        %1042 = vrot.lane.b32.xlu0 %v293, 28
        %v1043 = vpop.permute.xlu0 %1042
        %1044 = vrot.lane.b32.xlu0 %v295, 28
        %v1045 = vpop.permute.xlu0 %1044
        %1046 = vrot.lane.b32.xlu0 %v298, 28
        %v1047 = vpop.permute.xlu0 %1046
        %1048 = vrot.lane.b32.xlu0 %v300, 28
        %v1049 = vpop.permute.xlu0 %1048
        %1050 = vrot.lane.b32.xlu0 %v303, 28
        %v1051 = vpop.permute.xlu0 %1050
        %1052 = vrot.lane.b32.xlu0 %v305, 28
        %v1053 = vpop.permute.xlu0 %1052
        %1054 = vrot.lane.b32.xlu0 %v308, 28
        %v1055 = vpop.permute.xlu0 %1054
        %1056 = vrot.lane.b32.xlu0 %v310, 28
        %v1057 = vpop.permute.xlu0 %1056
        %1058 = vrot.lane.b32.xlu0 %v313, 28
        %v1059 = vpop.permute.xlu0 %1058
        %1060 = vrot.lane.b32.xlu0 %v315, 28
        %v1061 = vpop.permute.xlu0 %1060
        %1062 = vrot.lane.b32.xlu0 %v318, 28
        %v1063 = vpop.permute.xlu0 %1062
        %1064 = vrot.lane.b32.xlu0 %v320, 28
        %v1065 = vpop.permute.xlu0 %1064
        %1066 = vrot.lane.b32.xlu0 %v323, 28
        %v1067 = vpop.permute.xlu0 %1066
        %1068 = vrot.lane.b32.xlu0 %v325, 28
        %v1069 = vpop.permute.xlu0 %1068
        %1070 = vrot.lane.b32.xlu0 %v328, 28
        %v1071 = vpop.permute.xlu0 %1070
        %1072 = vrot.lane.b32.xlu0 %v330, 28
        %v1073 = vpop.permute.xlu0 %1072
        %1074 = vrot.lane.b32.xlu0 %v333, 28
        %v1075 = vpop.permute.xlu0 %1074
        %1076 = vrot.lane.b32.xlu0 %v335, 28
        %v1077 = vpop.permute.xlu0 %1076
        %1078 = vrot.lane.b32.xlu0 %v338, 28
        %v1079 = vpop.permute.xlu0 %1078
        %1080 = vrot.lane.b32.xlu0 %v340, 28
        %v1081 = vpop.permute.xlu0 %1080
        %1082 = vrot.lane.b32.xlu0 %v343, 28
        %v1083 = vpop.permute.xlu0 %1082
        %1084 = vrot.lane.b32.xlu0 %v345, 28
        %v1085 = vpop.permute.xlu0 %1084
        %1086 = vrot.lane.b32.xlu0 %v348, 28
        %v1087 = vpop.permute.xlu0 %1086
        %1088 = vrot.lane.b32.xlu0 %v350, 28
        %v1089 = vpop.permute.xlu0 %1088
        %1090 = vrot.lane.b32.xlu0 %v437, 28
        %v1091 = vpop.permute.xlu0 %1090
        %1092 = vrot.lane.b32.xlu0 %v439, 28
        %v1093 = vpop.permute.xlu0 %1092
        %1094 = vrot.lane.b32.xlu0 %v450, 28
        %v1095 = vpop.permute.xlu0 %1094
        %1096 = vrot.lane.b32.xlu0 %v452, 28
        %v1097 = vpop.permute.xlu0 %1096
        %1130 = vrot.lane.b32.xlu0 %v364, 32
        %v1131 = vpop.permute.xlu0 %1130
        %1132 = vrot.lane.b32.xlu0 %v366, 32
        %v1133 = vpop.permute.xlu0 %1132
        %1134 = vrot.lane.b32.xlu0 %v369, 32
        %v1135 = vpop.permute.xlu0 %1134
        %1136 = vrot.lane.b32.xlu0 %v371, 32
        %v1137 = vpop.permute.xlu0 %1136
        %1138 = vrot.lane.b32.xlu0 %v374, 32
        %v1139 = vpop.permute.xlu0 %1138
        %1140 = vrot.lane.b32.xlu0 %v376, 32
        %v1141 = vpop.permute.xlu0 %1140
        %1142 = vrot.lane.b32.xlu0 %v379, 32
        %v1143 = vpop.permute.xlu0 %1142
        %1144 = vrot.lane.b32.xlu0 %v381, 32
        %v1145 = vpop.permute.xlu0 %1144
        %1146 = vrot.lane.b32.xlu0 %v384, 32
        %v1147 = vpop.permute.xlu0 %1146
        %1148 = vrot.lane.b32.xlu0 %v386, 32
        %v1149 = vpop.permute.xlu0 %1148
        %1150 = vrot.lane.b32.xlu0 %v389, 32
        %v1151 = vpop.permute.xlu0 %1150
        %1152 = vrot.lane.b32.xlu0 %v391, 32
        %v1153 = vpop.permute.xlu0 %1152
        %1154 = vrot.lane.b32.xlu0 %v394, 32
        %v1155 = vpop.permute.xlu0 %1154
        %1156 = vrot.lane.b32.xlu0 %v396, 32
        %v1157 = vpop.permute.xlu0 %1156
        %1158 = vrot.lane.b32.xlu0 %v399, 32
        %v1159 = vpop.permute.xlu0 %1158
        %1160 = vrot.lane.b32.xlu0 %v401, 32
        %v1161 = vpop.permute.xlu0 %1160
        %1162 = vrot.lane.b32.xlu0 %v404, 32
        %v1163 = vpop.permute.xlu0 %1162
        %1164 = vrot.lane.b32.xlu0 %v406, 32
        %v1165 = vpop.permute.xlu0 %1164
        %1166 = vrot.lane.b32.xlu0 %v409, 32
        %v1167 = vpop.permute.xlu0 %1166
        %1168 = vrot.lane.b32.xlu0 %v411, 32
        %v1169 = vpop.permute.xlu0 %1168
        %1170 = vrot.lane.b32.xlu0 %v414, 32
        %v1171 = vpop.permute.xlu0 %1170
        %1172 = vrot.lane.b32.xlu0 %v416, 32
        %v1173 = vpop.permute.xlu0 %1172
        %1174 = vrot.lane.b32.xlu0 %v419, 32
        %v1175 = vpop.permute.xlu0 %1174
        %1176 = vrot.lane.b32.xlu0 %v421, 32
        %v1177 = vpop.permute.xlu0 %1176
        %1178 = vrot.lane.b32.xlu0 %v424, 32
        %v1179 = vpop.permute.xlu0 %1178
        %1180 = vrot.lane.b32.xlu0 %v426, 32
        %v1181 = vpop.permute.xlu0 %1180
        %1182 = vrot.lane.b32.xlu0 %v429, 32
        %v1183 = vpop.permute.xlu0 %1182
        %1184 = vrot.lane.b32.xlu0 %v431, 32
        %v1185 = vpop.permute.xlu0 %1184
        %1186 = vrot.lane.b32.xlu0 %v442, 32
        %v1187 = vpop.permute.xlu0 %1186
        %1188 = vrot.lane.b32.xlu0 %v444, 32
        %v1189 = vpop.permute.xlu0 %1188
        %1190 = vrot.lane.b32.xlu0 %v455, 32
        %v1191 = vpop.permute.xlu0 %1190
        %1192 = vrot.lane.b32.xlu0 %v457, 32
        %v1193 = vpop.permute.xlu0 %1192
        %vm1226 = vcmask 31744
        %v1227 = vsel %vm1226, %v168, %v459
        %v1228 = vsel %vm1226, %v169, %v461
        %v1229 = vsel %vm1226, %v171, %v463
        %v1230 = vsel %vm1226, %v172, %v465
        %v1231 = vsel %vm1226, %v174, %v467
        %v1232 = vsel %vm1226, %v175, %v469
        %v1233 = vsel %vm1226, %v177, %v471
        %v1234 = vsel %vm1226, %v178, %v473
        %v1235 = vsel %vm1226, %v180, %v475
        %v1236 = vsel %vm1226, %v181, %v477
        %v1237 = vsel %vm1226, %v183, %v479
        %v1238 = vsel %vm1226, %v184, %v481
        %v1239 = vsel %vm1226, %v186, %v483
        %v1240 = vsel %vm1226, %v187, %v485
        %v1241 = vsel %vm1226, %v189, %v487
        %v1242 = vsel %vm1226, %v190, %v489
        %v1243 = vsel %vm1226, %v192, %v491
        %v1244 = vsel %vm1226, %v193, %v493
        %v1245 = vsel %vm1226, %v195, %v495
        %v1246 = vsel %vm1226, %v196, %v497
        %v1247 = vsel %vm1226, %v198, %v499
        %v1248 = vsel %vm1226, %v199, %v501
        %v1249 = vsel %vm1226, %v201, %v503
        %v1250 = vsel %vm1226, %v202, %v505
        %v1251 = vsel %vm1226, %v204, %v507
        %v1252 = vsel %vm1226, %v205, %v509
        %v1253 = vsel %vm1226, %v207, %v511
        %v1254 = vsel %vm1226, %v208, %v513
        %v1255 = vsel %vm1226, %v210, %v515
        %v1256 = vsel %vm1226, %v211, %v517
        %v1257 = vsel %vm1226, %v213, %v519
        %v1258 = vsel %vm1226, %v214, %v521
        %vm1259 = vcmask 64512
        %v1260 = vsel %vm1259, %v1227, %v555
        %v1261 = vsel %vm1259, %v1228, %v557
        %v1262 = vsel %vm1259, %v1229, %v559
        %v1263 = vsel %vm1259, %v1230, %v561
        %v1264 = vsel %vm1259, %v1231, %v563
        %v1265 = vsel %vm1259, %v1232, %v565
        %v1266 = vsel %vm1259, %v1233, %v567
        %v1267 = vsel %vm1259, %v1234, %v569
        %v1268 = vsel %vm1259, %v1235, %v571
        %v1269 = vsel %vm1259, %v1236, %v573
        %v1270 = vsel %vm1259, %v1237, %v575
        %v1271 = vsel %vm1259, %v1238, %v577
        %v1272 = vsel %vm1259, %v1239, %v579
        %v1273 = vsel %vm1259, %v1240, %v581
        %v1274 = vsel %vm1259, %v1241, %v583
        %v1275 = vsel %vm1259, %v1242, %v585
        %v1276 = vsel %vm1259, %v1243, %v587
        %v1277 = vsel %vm1259, %v1244, %v589
        %v1278 = vsel %vm1259, %v1245, %v591
        %v1279 = vsel %vm1259, %v1246, %v593
        %v1280 = vsel %vm1259, %v1247, %v595
        %v1281 = vsel %vm1259, %v1248, %v597
        %v1282 = vsel %vm1259, %v1249, %v599
        %v1283 = vsel %vm1259, %v1250, %v601
        %v1284 = vsel %vm1259, %v1251, %v603
        %v1285 = vsel %vm1259, %v1252, %v605
        %v1286 = vsel %vm1259, %v1253, %v607
        %v1287 = vsel %vm1259, %v1254, %v609
        %v1288 = vsel %vm1259, %v1255, %v611
        %v1289 = vsel %vm1259, %v1256, %v613
        %v1290 = vsel %vm1259, %v1257, %v615
        %v1291 = vsel %vm1259, %v1258, %v617
        %vm1292 = vcmask 97280
        %v1293 = vsel %vm1292, %v1260, %v651
        %v1294 = vsel %vm1292, %v1261, %v653
        %v1295 = vsel %vm1292, %v1262, %v655
        %v1296 = vsel %vm1292, %v1263, %v657
        %v1297 = vsel %vm1292, %v1264, %v659
        %v1298 = vsel %vm1292, %v1265, %v661
        %v1299 = vsel %vm1292, %v1266, %v663
        %v1300 = vsel %vm1292, %v1267, %v665
        %v1301 = vsel %vm1292, %v1268, %v667
        %v1302 = vsel %vm1292, %v1269, %v669
        %v1303 = vsel %vm1292, %v1270, %v671
        %v1304 = vsel %vm1292, %v1271, %v673
        %v1305 = vsel %vm1292, %v1272, %v675
        %v1306 = vsel %vm1292, %v1273, %v677
        %v1307 = vsel %vm1292, %v1274, %v679
        %v1308 = vsel %vm1292, %v1275, %v681
        %v1309 = vsel %vm1292, %v1276, %v683
        %v1310 = vsel %vm1292, %v1277, %v685
        %v1311 = vsel %vm1292, %v1278, %v687
        %v1312 = vsel %vm1292, %v1279, %v689
        %v1313 = vsel %vm1292, %v1280, %v691
        %v1314 = vsel %vm1292, %v1281, %v693
        %v1315 = vsel %vm1292, %v1282, %v695
        %v1316 = vsel %vm1292, %v1283, %v697
        %v1317 = vsel %vm1292, %v1284, %v699
        %v1318 = vsel %vm1292, %v1285, %v701
        %v1319 = vsel %vm1292, %v1286, %v703
        %v1320 = vsel %vm1292, %v1287, %v705
        %v1321 = vsel %vm1292, %v1288, %v707
        %v1322 = vsel %vm1292, %v1289, %v709
        %v1323 = vsel %vm1292, %v1290, %v711
        %v1324 = vsel %vm1292, %v1291, %v713
        %vm1325 = vcmask 130048
        %v1326 = vsel %vm1325, %v1293, %v747
        %v1327 = vsel %vm1325, %v1294, %v749
        %v1328 = vsel %vm1325, %v1295, %v751
        %v1329 = vsel %vm1325, %v1296, %v753
        %v1330 = vsel %vm1325, %v1297, %v755
        %v1331 = vsel %vm1325, %v1298, %v757
        %v1332 = vsel %vm1325, %v1299, %v759
        %v1333 = vsel %vm1325, %v1300, %v761
        %v1334 = vsel %vm1325, %v1301, %v763
        %v1335 = vsel %vm1325, %v1302, %v765
        %v1336 = vsel %vm1325, %v1303, %v767
        %v1337 = vsel %vm1325, %v1304, %v769
        %v1338 = vsel %vm1325, %v1305, %v771
        %v1339 = vsel %vm1325, %v1306, %v773
        %v1340 = vsel %vm1325, %v1307, %v775
        %v1341 = vsel %vm1325, %v1308, %v777
        %v1342 = vsel %vm1325, %v1309, %v779
        %v1343 = vsel %vm1325, %v1310, %v781
        %v1344 = vsel %vm1325, %v1311, %v783
        %v1345 = vsel %vm1325, %v1312, %v785
        %v1346 = vsel %vm1325, %v1313, %v787
        %v1347 = vsel %vm1325, %v1314, %v789
        %v1348 = vsel %vm1325, %v1315, %v791
        %v1349 = vsel %vm1325, %v1316, %v793
        %v1350 = vsel %vm1325, %v1317, %v795
        %v1351 = vsel %vm1325, %v1318, %v797
        %v1352 = vsel %vm1325, %v1319, %v799
        %v1353 = vsel %vm1325, %v1320, %v801
        %v1354 = vsel %vm1325, %v1321, %v803
        %v1355 = vsel %vm1325, %v1322, %v805
        %v1356 = vsel %vm1325, %v1323, %v807
        %v1357 = vsel %vm1325, %v1324, %v809
        %vm1358 = vcmask 162816
        %v1359 = vsel %vm1358, %v1326, %v843
        %v1360 = vsel %vm1358, %v1327, %v845
        %v1361 = vsel %vm1358, %v1328, %v847
        %v1362 = vsel %vm1358, %v1329, %v849
        %v1363 = vsel %vm1358, %v1330, %v851
        %v1364 = vsel %vm1358, %v1331, %v853
        %v1365 = vsel %vm1358, %v1332, %v855
        %v1366 = vsel %vm1358, %v1333, %v857
        %v1367 = vsel %vm1358, %v1334, %v859
        %v1368 = vsel %vm1358, %v1335, %v861
        %v1369 = vsel %vm1358, %v1336, %v863
        %v1370 = vsel %vm1358, %v1337, %v865
        %v1371 = vsel %vm1358, %v1338, %v867
        %v1372 = vsel %vm1358, %v1339, %v869
        %v1373 = vsel %vm1358, %v1340, %v871
        %v1374 = vsel %vm1358, %v1341, %v873
        %v1375 = vsel %vm1358, %v1342, %v875
        %v1376 = vsel %vm1358, %v1343, %v877
        %v1377 = vsel %vm1358, %v1344, %v879
        %v1378 = vsel %vm1358, %v1345, %v881
        %v1379 = vsel %vm1358, %v1346, %v883
        %v1380 = vsel %vm1358, %v1347, %v885
        %v1381 = vsel %vm1358, %v1348, %v887
        %v1382 = vsel %vm1358, %v1349, %v889
        %v1383 = vsel %vm1358, %v1350, %v891
        %v1384 = vsel %vm1358, %v1351, %v893
        %v1385 = vsel %vm1358, %v1352, %v895
        %v1386 = vsel %vm1358, %v1353, %v897
        %v1387 = vsel %vm1358, %v1354, %v899
        %v1388 = vsel %vm1358, %v1355, %v901
        %v1389 = vsel %vm1358, %v1356, %v903
        %v1390 = vsel %vm1358, %v1357, %v905
        %vm1391 = vcmask 195584
        %v1392 = vsel %vm1391, %v1359, %v939
        %v1393 = vsel %vm1391, %v1360, %v941
        %v1394 = vsel %vm1391, %v1361, %v943
        %v1395 = vsel %vm1391, %v1362, %v945
        %v1396 = vsel %vm1391, %v1363, %v947
        %v1397 = vsel %vm1391, %v1364, %v949
        %v1398 = vsel %vm1391, %v1365, %v951
        %v1399 = vsel %vm1391, %v1366, %v953
        %v1400 = vsel %vm1391, %v1367, %v955
        %v1401 = vsel %vm1391, %v1368, %v957
        %v1402 = vsel %vm1391, %v1369, %v959
        %v1403 = vsel %vm1391, %v1370, %v961
        %v1404 = vsel %vm1391, %v1371, %v963
        %v1405 = vsel %vm1391, %v1372, %v965
        %v1406 = vsel %vm1391, %v1373, %v967
        %v1407 = vsel %vm1391, %v1374, %v969
        %v1408 = vsel %vm1391, %v1375, %v971
        %v1409 = vsel %vm1391, %v1376, %v973
        %v1410 = vsel %vm1391, %v1377, %v975
        %v1411 = vsel %vm1391, %v1378, %v977
        %v1412 = vsel %vm1391, %v1379, %v979
        %v1413 = vsel %vm1391, %v1380, %v981
        %v1414 = vsel %vm1391, %v1381, %v983
        %v1415 = vsel %vm1391, %v1382, %v985
        %v1416 = vsel %vm1391, %v1383, %v987
        %v1417 = vsel %vm1391, %v1384, %v989
        %v1418 = vsel %vm1391, %v1385, %v991
        %v1419 = vsel %vm1391, %v1386, %v993
        %v1420 = vsel %vm1391, %v1387, %v995
        %v1421 = vsel %vm1391, %v1388, %v997
        %v1422 = vsel %vm1391, %v1389, %v999
        %v1423 = vsel %vm1391, %v1390, %v1001
        %vm1424 = vcmask 228352
        %v1425 = vsel %vm1424, %v1392, %v1035
        %v1426 = vsel %vm1424, %v1393, %v1037
        %v1427 = vsel %vm1424, %v1394, %v1039
        %v1428 = vsel %vm1424, %v1395, %v1041
        %v1429 = vsel %vm1424, %v1396, %v1043
        %v1430 = vsel %vm1424, %v1397, %v1045
        %v1431 = vsel %vm1424, %v1398, %v1047
        %v1432 = vsel %vm1424, %v1399, %v1049
        %v1433 = vsel %vm1424, %v1400, %v1051
        %v1434 = vsel %vm1424, %v1401, %v1053
        %v1435 = vsel %vm1424, %v1402, %v1055
        %v1436 = vsel %vm1424, %v1403, %v1057
        %v1437 = vsel %vm1424, %v1404, %v1059
        %v1438 = vsel %vm1424, %v1405, %v1061
        %v1439 = vsel %vm1424, %v1406, %v1063
        %v1440 = vsel %vm1424, %v1407, %v1065
        %v1441 = vsel %vm1424, %v1408, %v1067
        %v1442 = vsel %vm1424, %v1409, %v1069
        %v1443 = vsel %vm1424, %v1410, %v1071
        %v1444 = vsel %vm1424, %v1411, %v1073
        %v1445 = vsel %vm1424, %v1412, %v1075
        %v1446 = vsel %vm1424, %v1413, %v1077
        %v1447 = vsel %vm1424, %v1414, %v1079
        %v1448 = vsel %vm1424, %v1415, %v1081
        %v1449 = vsel %vm1424, %v1416, %v1083
        %v1450 = vsel %vm1424, %v1417, %v1085
        %v1451 = vsel %vm1424, %v1418, %v1087
        %v1452 = vsel %vm1424, %v1419, %v1089
        %v1453 = vsel %vm1424, %v1420, %v1091
        %v1454 = vsel %vm1424, %v1421, %v1093
        %v1455 = vsel %vm1424, %v1422, %v1095
        %v1456 = vsel %vm1424, %v1423, %v1097
        %vm1457 = vcmask 261120
        %v1458 = vsel %vm1457, %v1425, %v1131
        %v1459 = vsel %vm1457, %v1426, %v1133
        %v1460 = vsel %vm1457, %v1427, %v1135
        %v1461 = vsel %vm1457, %v1428, %v1137
        %v1462 = vsel %vm1457, %v1429, %v1139
        %v1463 = vsel %vm1457, %v1430, %v1141
        %v1464 = vsel %vm1457, %v1431, %v1143
        %v1465 = vsel %vm1457, %v1432, %v1145
        %v1466 = vsel %vm1457, %v1433, %v1147
        %v1467 = vsel %vm1457, %v1434, %v1149
        %v1468 = vsel %vm1457, %v1435, %v1151
        %v1469 = vsel %vm1457, %v1436, %v1153
        %v1470 = vsel %vm1457, %v1437, %v1155
        %v1471 = vsel %vm1457, %v1438, %v1157
        %v1472 = vsel %vm1457, %v1439, %v1159
        %v1473 = vsel %vm1457, %v1440, %v1161
        %v1474 = vsel %vm1457, %v1441, %v1163
        %v1475 = vsel %vm1457, %v1442, %v1165
        %v1476 = vsel %vm1457, %v1443, %v1167
        %v1477 = vsel %vm1457, %v1444, %v1169
        %v1478 = vsel %vm1457, %v1445, %v1171
        %v1479 = vsel %vm1457, %v1446, %v1173
        %v1480 = vsel %vm1457, %v1447, %v1175
        %v1481 = vsel %vm1457, %v1448, %v1177
        %v1482 = vsel %vm1457, %v1449, %v1179
        %v1483 = vsel %vm1457, %v1450, %v1181
        %v1484 = vsel %vm1457, %v1451, %v1183
        %v1485 = vsel %vm1457, %v1452, %v1185
        %v1486 = vsel %vm1457, %v1453, %v1187
        %v1487 = vsel %vm1457, %v1454, %v1189
        %v1488 = vsel %vm1457, %v1455, %v1191
        %v1489 = vsel %vm1457, %v1456, %v1193
        %vm1490 = vcmask 293888
        %v1491 = vsel %vm1490, %v1458, 0.0
        %v1492 = vsel %vm1490, %v1459, 0.0
        %v1493 = vsel %vm1490, %v1460, 0.0
        %v1494 = vsel %vm1490, %v1461, 0.0
        %v1495 = vsel %vm1490, %v1462, 0.0
        %v1496 = vsel %vm1490, %v1463, 0.0
        %v1497 = vsel %vm1490, %v1464, 0.0
        %v1498 = vsel %vm1490, %v1465, 0.0
        %v1499 = vsel %vm1490, %v1466, 0.0
        %v1500 = vsel %vm1490, %v1467, 0.0
        %v1501 = vsel %vm1490, %v1468, 0.0
        %v1502 = vsel %vm1490, %v1469, 0.0
        %v1503 = vsel %vm1490, %v1470, 0.0
        %v1504 = vsel %vm1490, %v1471, 0.0
        %v1505 = vsel %vm1490, %v1472, 0.0
        %v1506 = vsel %vm1490, %v1473, 0.0
        %v1507 = vsel %vm1490, %v1474, 0.0
        %v1508 = vsel %vm1490, %v1475, 0.0
        %v1509 = vsel %vm1490, %v1476, 0.0
        %v1510 = vsel %vm1490, %v1477, 0.0
        %v1511 = vsel %vm1490, %v1478, 0.0
        %v1512 = vsel %vm1490, %v1479, 0.0
        %v1513 = vsel %vm1490, %v1480, 0.0
        %v1514 = vsel %vm1490, %v1481, 0.0
        %v1515 = vsel %vm1490, %v1482, 0.0
        %v1516 = vsel %vm1490, %v1483, 0.0
        %v1517 = vsel %vm1490, %v1484, 0.0
        %v1518 = vsel %vm1490, %v1485, 0.0
        %v1519 = vsel %vm1490, %v1486, 0.0
        %v1520 = vsel %vm1490, %v1487, 0.0
        %v1521 = vsel %vm1490, %v1488, 0.0
        %v1522 = vsel %vm1490, %v1489, 0.0
        %v1523 = vld [vmem:[%s1] sm:$0xff]
        %v1524 = vld [vmem:[%s1 + $0x8] sm:$0xff]
        %v1525 = vld [vmem:[%s1 + $0x10] sm:$0xff]
        %v1526 = vld [vmem:[%s1 + $0x18] sm:$0xff]
        %v1527 = vld [vmem:[%s1 + $0x20] sm:$0xff]
        %v1528 = vld [vmem:[%s2] sm:$0x1]
        %v1530 = vlaneseq
        %v1531 = vshrl.u32 %v1530, 7
        %v1532 = vsub.s32 0, %v1531
        %v1533 = vrot.slane %v1528, %v1532
        %vm1535 = vcmask 326656
        %v1537 = vsel %vm1535, %v1491, 0
        %v1540 = vsel %vm1535, %v1492, 0
        %v1543 = vsel %vm1535, %v1493, 0
        %v1546 = vsel %vm1535, %v1494, 0
        %v1549 = vsel %vm1535, %v1495, 0
        %v1552 = vsel %vm1535, %v1496, 0
        %v1555 = vsel %vm1535, %v1497, 0
        %v1558 = vsel %vm1535, %v1498, 0
        %v1561 = vsel %vm1535, %v1499, 0
        %v1564 = vsel %vm1535, %v1500, 0
        %v1567 = vsel %vm1535, %v1501, 0
        %v1570 = vsel %vm1535, %v1502, 0
        %v1573 = vsel %vm1535, %v1503, 0
        %v1576 = vsel %vm1535, %v1504, 0
        %v1579 = vsel %vm1535, %v1505, 0
        %v1582 = vsel %vm1535, %v1506, 0
        %v1585 = vsel %vm1535, %v1507, 0
        %v1588 = vsel %vm1535, %v1508, 0
        %v1591 = vsel %vm1535, %v1509, 0
        %v1594 = vsel %vm1535, %v1510, 0
        %v1597 = vsel %vm1535, %v1511, 0
        %v1600 = vsel %vm1535, %v1512, 0
        %v1603 = vsel %vm1535, %v1513, 0
        %v1606 = vsel %vm1535, %v1514, 0
        %v1609 = vsel %vm1535, %v1515, 0
        %v1612 = vsel %vm1535, %v1516, 0
        %v1615 = vsel %vm1535, %v1517, 0
        %v1618 = vsel %vm1535, %v1518, 0
        %v1621 = vsel %vm1535, %v1519, 0
        %v1624 = vsel %vm1535, %v1520, 0
        %v1627 = vsel %vm1535, %v1521, 0
        %v1630 = vsel %vm1535, %v1522, 0
        %1632 = vmatprep.subr.mxu0 0.0
        %1633 = vmatpush1.msra.mxu0 %v1523
        %1634 = vmatprep.subr.mxu0 0.0
        %1635 = vmatpush1.msra.mxu0 %v1524
        %1636 = vmatprep.subr.mxu0 0.0
        %1637 = vmatpush1.msra.mxu0 %v1525
        %1638 = vmatprep.subr.mxu0 0.0
        %1639 = vmatpush1.msra.mxu0 %v1526
        %1640 = vmatprep.subr.mxu0 0.0
        %1641 = vmatpush1.msra.mxu0 %v1527
        %1642 = vmatprep.subr.mxu0 0.0
        %1643 = vmatpush1.msra.mxu0 0.0
        %1644 = vmatprep.subr.mxu0 0.0
        %1645 = vmatpush1.msra.mxu0 0.0
        %1646 = vmatprep.subr.mxu0 0.0
        %1647 = vmatpush1.msra.mxu0 0.0
        %1648 = vmatprep.subr.mxu0 0.0
        %1649 = vmatpush1.msra.mxu0 0.0
        %1650 = vmatprep.subr.mxu0 0.0
        %1651 = vmatpush1.msra.mxu0 0.0
        %1652 = vmatprep.subr.mxu0 0.0
        %1653 = vmatpush1.msra.mxu0 0.0
        %1654 = vmatprep.subr.mxu0 0.0
        %1655 = vmatpush1.msra.mxu0 0.0
        %1656 = vmatprep.subr.mxu0 0.0
        %1657 = vmatpush1.msra.mxu0 0.0
        %1658 = vmatprep.subr.mxu0 0.0
        %1659 = vmatpush1.msra.mxu0 0.0
        %1660 = vmatprep.subr.mxu0 0.0
        %1661 = vmatpush1.msra.mxu0 0.0
        %1662 = vmatprep.subr.mxu0 0.0
        %1663 = vmatpush1.msra.mxu0 0.0
        %1664 = vmatprep.subr.mxu0 0.0
        %1665 = vmatpush1.msra.mxu0 0.0
        %1666 = vmatprep.subr.mxu0 0.0
        %1667 = vmatpush1.msra.mxu0 0.0
        %1668 = vmatprep.subr.mxu0 0.0
        %1669 = vmatpush1.msra.mxu0 0.0
        %1670 = vmatprep.subr.mxu0 0.0
        %1671 = vmatpush1.msra.mxu0 0.0
        %1672 = vmatprep.subr.mxu0 0.0
        %1673 = vmatpush1.msra.mxu0 0.0
        %1674 = vmatprep.subr.mxu0 0.0
        %1675 = vmatpush1.msra.mxu0 0.0
        %1676 = vmatprep.subr.mxu0 0.0
        %1677 = vmatpush1.msra.mxu0 0.0
        %1678 = vmatprep.subr.mxu0 0.0
        %1679 = vmatpush1.msra.mxu0 0.0
        %1680 = vmatprep.subr.mxu0 0.0
        %1681 = vmatpush1.msra.mxu0 0.0
        %1682 = vmatprep.subr.mxu0 0.0
        %1683 = vmatpush1.msra.mxu0 0.0
        %1684 = vmatprep.subr.mxu0 0.0
        %1685 = vmatpush1.msra.mxu0 0.0
        %1686 = vmatprep.subr.mxu0 0.0
        %1687 = vmatpush1.msra.mxu0 0.0
        %1688 = vmatprep.subr.mxu0 0.0
        %1689 = vmatpush1.msra.mxu0 0.0
        %1690 = vmatprep.subr.mxu0 0.0
        %1691 = vmatpush1.msra.mxu0 0.0
        %1692 = vmatprep.subr.mxu0 0.0
        %1693 = vmatpush1.msra.mxu0 0.0
        %1694 = vmatprep.subr.mxu0 0.0
        %1695 = vmatpush1.msra.mxu0 0.0
        %1696 = vmatprep.mubr.f32.mxu0 0.0
        %1697 = vmatmul.mubr.f32.gmra.mrb[0].mxu0 %v1537
        %v1698 = vpop.f32.mrb[0].mxu0
        %v1699 = vadd.f32 %v1533, %v1698
        %v1700 = vpop.f32.mrb[0].mxu0
        %1701 = vmatprep.mubr.f32.mxu0 0.0
        %1702 = vmatmul.mubr.f32.gmra.mrb[0].mxu0 %v1540
        %v1703 = vpop.f32.mrb[0].mxu0
        %v1704 = vadd.f32 %v1533, %v1703
        %v1705 = vpop.f32.mrb[0].mxu0
        %1706 = vmatprep.mubr.f32.mxu0 0.0
        %1707 = vmatmul.mubr.f32.gmra.mrb[0].mxu0 %v1543
        %v1708 = vpop.f32.mrb[0].mxu0
        %v1709 = vadd.f32 %v1533, %v1708
        %v1710 = vpop.f32.mrb[0].mxu0
        %1711 = vmatprep.mubr.f32.mxu0 0.0
        %1712 = vmatmul.mubr.f32.gmra.mrb[0].mxu0 %v1546
        %v1713 = vpop.f32.mrb[0].mxu0
        %v1714 = vadd.f32 %v1533, %v1713
        %v1715 = vpop.f32.mrb[0].mxu0
        %1716 = vmatprep.mubr.f32.mxu0 0.0
        %1717 = vmatmul.mubr.f32.gmra.mrb[0].mxu0 %v1549
        %v1718 = vpop.f32.mrb[0].mxu0
        %v1719 = vadd.f32 %v1533, %v1718
        %v1720 = vpop.f32.mrb[0].mxu0
        %1721 = vmatprep.mubr.f32.mxu0 0.0
        %1722 = vmatmul.mubr.f32.gmra.mrb[0].mxu0 %v1552
        %v1723 = vpop.f32.mrb[0].mxu0
        %v1724 = vadd.f32 %v1533, %v1723
        %v1725 = vpop.f32.mrb[0].mxu0
        %1726 = vmatprep.mubr.f32.mxu0 0.0
        %1727 = vmatmul.mubr.f32.gmra.mrb[0].mxu0 %v1555
        %v1728 = vpop.f32.mrb[0].mxu0
        %v1729 = vadd.f32 %v1533, %v1728
        %v1730 = vpop.f32.mrb[0].mxu0
        %1731 = vmatprep.mubr.f32.mxu0 0.0
        %1732 = vmatmul.mubr.f32.gmra.mrb[0].mxu0 %v1558
        %v1733 = vpop.f32.mrb[0].mxu0
        %v1734 = vadd.f32 %v1533, %v1733
        %v1735 = vpop.f32.mrb[0].mxu0
        %1736 = vmatprep.mubr.f32.mxu0 0.0
        %1737 = vmatmul.mubr.f32.gmra.mrb[0].mxu0 %v1561
        %v1738 = vpop.f32.mrb[0].mxu0
        %v1739 = vadd.f32 %v1533, %v1738
        %v1740 = vpop.f32.mrb[0].mxu0
        %1741 = vmatprep.mubr.f32.mxu0 0.0
        %1742 = vmatmul.mubr.f32.gmra.mrb[0].mxu0 %v1564
        %v1743 = vpop.f32.mrb[0].mxu0
        %v1744 = vadd.f32 %v1533, %v1743
        %v1745 = vpop.f32.mrb[0].mxu0
        %1746 = vmatprep.mubr.f32.mxu0 0.0
        %1747 = vmatmul.mubr.f32.gmra.mrb[0].mxu0 %v1567
        %v1748 = vpop.f32.mrb[0].mxu0
        %v1749 = vadd.f32 %v1533, %v1748
        %v1750 = vpop.f32.mrb[0].mxu0
        %1751 = vmatprep.mubr.f32.mxu0 0.0
        %1752 = vmatmul.mubr.f32.gmra.mrb[0].mxu0 %v1570
        %v1753 = vpop.f32.mrb[0].mxu0
        %v1754 = vadd.f32 %v1533, %v1753
        %v1755 = vpop.f32.mrb[0].mxu0
        %1756 = vmatprep.mubr.f32.mxu0 0.0
        %1757 = vmatmul.mubr.f32.gmra.mrb[0].mxu0 %v1573
        %v1758 = vpop.f32.mrb[0].mxu0
        %v1759 = vadd.f32 %v1533, %v1758
        %v1760 = vpop.f32.mrb[0].mxu0
        %1761 = vmatprep.mubr.f32.mxu0 0.0
        %1762 = vmatmul.mubr.f32.gmra.mrb[0].mxu0 %v1576
        %v1763 = vpop.f32.mrb[0].mxu0
        %v1764 = vadd.f32 %v1533, %v1763
        %v1765 = vpop.f32.mrb[0].mxu0
        %1766 = vmatprep.mubr.f32.mxu0 0.0
        %1767 = vmatmul.mubr.f32.gmra.mrb[0].mxu0 %v1579
        %v1768 = vpop.f32.mrb[0].mxu0
        %v1769 = vadd.f32 %v1533, %v1768
        %v1770 = vpop.f32.mrb[0].mxu0
        %1771 = vmatprep.mubr.f32.mxu0 0.0
        %1772 = vmatmul.mubr.f32.gmra.mrb[0].mxu0 %v1582
        %v1773 = vpop.f32.mrb[0].mxu0
        %v1774 = vadd.f32 %v1533, %v1773
        %v1775 = vpop.f32.mrb[0].mxu0
        %1776 = vmatprep.mubr.f32.mxu0 0.0
        %1777 = vmatmul.mubr.f32.gmra.mrb[0].mxu0 %v1585
        %v1778 = vpop.f32.mrb[0].mxu0
        %v1779 = vadd.f32 %v1533, %v1778
        %v1780 = vpop.f32.mrb[0].mxu0
        %1781 = vmatprep.mubr.f32.mxu0 0.0
        %1782 = vmatmul.mubr.f32.gmra.mrb[0].mxu0 %v1588
        %v1783 = vpop.f32.mrb[0].mxu0
        %v1784 = vadd.f32 %v1533, %v1783
        %v1785 = vpop.f32.mrb[0].mxu0
        %1786 = vmatprep.mubr.f32.mxu0 0.0
        %1787 = vmatmul.mubr.f32.gmra.mrb[0].mxu0 %v1591
        %v1788 = vpop.f32.mrb[0].mxu0
        %v1789 = vadd.f32 %v1533, %v1788
        %v1790 = vpop.f32.mrb[0].mxu0
        %1791 = vmatprep.mubr.f32.mxu0 0.0
        %1792 = vmatmul.mubr.f32.gmra.mrb[0].mxu0 %v1594
        %v1793 = vpop.f32.mrb[0].mxu0
        %v1794 = vadd.f32 %v1533, %v1793
        %v1795 = vpop.f32.mrb[0].mxu0
        %1796 = vmatprep.mubr.f32.mxu0 0.0
        %1797 = vmatmul.mubr.f32.gmra.mrb[0].mxu0 %v1597
        %v1798 = vpop.f32.mrb[0].mxu0
        %v1799 = vadd.f32 %v1533, %v1798
        %v1800 = vpop.f32.mrb[0].mxu0
        %1801 = vmatprep.mubr.f32.mxu0 0.0
        %1802 = vmatmul.mubr.f32.gmra.mrb[0].mxu0 %v1600
        %v1803 = vpop.f32.mrb[0].mxu0
        %v1804 = vadd.f32 %v1533, %v1803
        %v1805 = vpop.f32.mrb[0].mxu0
        %1806 = vmatprep.mubr.f32.mxu0 0.0
        %1807 = vmatmul.mubr.f32.gmra.mrb[0].mxu0 %v1603
        %v1808 = vpop.f32.mrb[0].mxu0
        %v1809 = vadd.f32 %v1533, %v1808
        %v1810 = vpop.f32.mrb[0].mxu0
        %1811 = vmatprep.mubr.f32.mxu0 0.0
        %1812 = vmatmul.mubr.f32.gmra.mrb[0].mxu0 %v1606
        %v1813 = vpop.f32.mrb[0].mxu0
        %v1814 = vadd.f32 %v1533, %v1813
        %v1815 = vpop.f32.mrb[0].mxu0
        %1816 = vmatprep.mubr.f32.mxu0 0.0
        %1817 = vmatmul.mubr.f32.gmra.mrb[0].mxu0 %v1609
        %v1818 = vpop.f32.mrb[0].mxu0
        %v1819 = vadd.f32 %v1533, %v1818
        %v1820 = vpop.f32.mrb[0].mxu0
        %1821 = vmatprep.mubr.f32.mxu0 0.0
        %1822 = vmatmul.mubr.f32.gmra.mrb[0].mxu0 %v1612
        %v1823 = vpop.f32.mrb[0].mxu0
        %v1824 = vadd.f32 %v1533, %v1823
        %v1825 = vpop.f32.mrb[0].mxu0
        %1826 = vmatprep.mubr.f32.mxu0 0.0
        %1827 = vmatmul.mubr.f32.gmra.mrb[0].mxu0 %v1615
        %v1828 = vpop.f32.mrb[0].mxu0
        %v1829 = vadd.f32 %v1533, %v1828
        %v1830 = vpop.f32.mrb[0].mxu0
        %1831 = vmatprep.mubr.f32.mxu0 0.0
        %1832 = vmatmul.mubr.f32.gmra.mrb[0].mxu0 %v1618
        %v1833 = vpop.f32.mrb[0].mxu0
        %v1834 = vadd.f32 %v1533, %v1833
        %v1835 = vpop.f32.mrb[0].mxu0
        %1836 = vmatprep.mubr.f32.mxu0 0.0
        %1837 = vmatmul.mubr.f32.gmra.mrb[0].mxu0 %v1621
        %v1838 = vpop.f32.mrb[0].mxu0
        %v1839 = vadd.f32 %v1533, %v1838
        %v1840 = vpop.f32.mrb[0].mxu0
        %1841 = vmatprep.mubr.f32.mxu0 0.0
        %1842 = vmatmul.mubr.f32.gmra.mrb[0].mxu0 %v1624
        %v1843 = vpop.f32.mrb[0].mxu0
        %v1844 = vadd.f32 %v1533, %v1843
        %v1845 = vpop.f32.mrb[0].mxu0
        %1846 = vmatprep.mubr.f32.mxu0 0.0
        %1847 = vmatmul.mubr.f32.gmra.mrb[0].mxu0 %v1627
        %v1848 = vpop.f32.mrb[0].mxu0
        %v1849 = vadd.f32 %v1533, %v1848
        %v1850 = vpop.f32.mrb[0].mxu0
        %1851 = vmatprep.mubr.f32.mxu0 0.0
        %1852 = vmatmul.mubr.f32.gmra.mrb[0].mxu0 %v1630
        %v1853 = vpop.f32.mrb[0].mxu0
        %v1854 = vadd.f32 %v1533, %v1853
        %v1855 = vpop.f32.mrb[0].mxu0
        %1856 = vdwg.mxu0
        %v1857 = vmax.f32 %v1699, 0.0
        %v1858 = vmax.f32 %v1704, 0.0
        %v1859 = vmax.f32 %v1709, 0.0
        %v1860 = vmax.f32 %v1714, 0.0
        %v1861 = vmax.f32 %v1719, 0.0
        %v1862 = vmax.f32 %v1724, 0.0
        %v1863 = vmax.f32 %v1729, 0.0
        %v1864 = vmax.f32 %v1734, 0.0
        %v1865 = vmax.f32 %v1739, 0.0
        %v1866 = vmax.f32 %v1744, 0.0
        %v1867 = vmax.f32 %v1749, 0.0
        %v1868 = vmax.f32 %v1754, 0.0
        %v1869 = vmax.f32 %v1759, 0.0
        %v1870 = vmax.f32 %v1764, 0.0
        %v1871 = vmax.f32 %v1769, 0.0
        %v1872 = vmax.f32 %v1774, 0.0
        %v1873 = vmax.f32 %v1779, 0.0
        %v1874 = vmax.f32 %v1784, 0.0
        %v1875 = vmax.f32 %v1789, 0.0
        %v1876 = vmax.f32 %v1794, 0.0
        %v1877 = vmax.f32 %v1799, 0.0
        %v1878 = vmax.f32 %v1804, 0.0
        %v1879 = vmax.f32 %v1809, 0.0
        %v1880 = vmax.f32 %v1814, 0.0
        %v1881 = vmax.f32 %v1819, 0.0
        %v1882 = vmax.f32 %v1824, 0.0
        %v1883 = vmax.f32 %v1829, 0.0
        %v1884 = vmax.f32 %v1834, 0.0
        %v1885 = vmax.f32 %v1839, 0.0
        %v1886 = vmax.f32 %v1844, 0.0
        %v1887 = vmax.f32 %v1849, 0.0
        %v1888 = vmax.f32 %v1854, 0.0
        %v1889 = vadd.f32 %v1857, %v1858
        %v1890 = vadd.f32 %v1889, %v1859
        %v1891 = vadd.f32 %v1890, %v1860
        %v1892 = vadd.f32 %v1891, %v1861
        %v1893 = vadd.f32 %v1892, %v1862
        %v1894 = vadd.f32 %v1893, %v1863
        %v1895 = vadd.f32 %v1894, %v1864
        %v1896 = vadd.f32 %v1895, %v1865
        %v1897 = vadd.f32 %v1896, %v1866
        %v1898 = vadd.f32 %v1897, %v1867
        %v1899 = vadd.f32 %v1898, %v1868
        %v1900 = vadd.f32 %v1899, %v1869
        %v1901 = vadd.f32 %v1900, %v1870
        %v1902 = vadd.f32 %v1901, %v1871
        %v1903 = vadd.f32 %v1902, %v1872
        %v1904 = vadd.f32 %v1903, %v1873
        %v1905 = vadd.f32 %v1904, %v1874
        %v1906 = vadd.f32 %v1905, %v1875
        %v1907 = vadd.f32 %v1906, %v1876
        %v1908 = vadd.f32 %v1907, %v1877
        %v1909 = vadd.f32 %v1908, %v1878
        %v1910 = vadd.f32 %v1909, %v1879
        %v1911 = vadd.f32 %v1910, %v1880
        %v1912 = vadd.f32 %v1911, %v1881
        %v1913 = vadd.f32 %v1912, %v1882
        %v1914 = vadd.f32 %v1913, %v1883
        %v1915 = vadd.f32 %v1914, %v1884
        %v1916 = vadd.f32 %v1915, %v1885
        %v1917 = vadd.f32 %v1916, %v1886
        %v1918 = vadd.f32 %v1917, %v1887
        %v1919 = vadd.f32 %v1918, %v1888
        %v1920 = vrot.slane %v1919, 4
        %v1921 = vadd.f32 %v1919, %v1920
        %v1922 = vrot.slane %v1921, 2
        %v1923 = vadd.f32 %v1921, %v1922
        %v1924 = vrot.slane %v1923, 1
        %v1925 = vadd.f32 %v1923, %v1924
        %v1926 = vmul.f32 %v1925, 0.00390625
        %1927 = vst [vmem:[%s162] sm:$0x1] %v1926
        %s1928 = sand.u32 %s93, 1
        %s1929 = scalar_lea.sflag [#allocation3], %s1928
        %s1930 = sand.u32 %s93, 1
        %s1931 = scalar_lea.vmem [#allocation2], %s1930
        // Predicated region
        $region33: #{tpu_custom_call.1} parent=31 // pred_check
          %p1932 = pneg %p103
        $region34: #{tpu_custom_call.1} parent=31 // pred_check_branch
          %1934 = sbr.rel (%p1932) target = $region36
        $region35: #{tpu_custom_call.1} parent=31 // pred_region
          %s1936 = ssub.s32 16, 16
          %1937 = vsyncadd %s1929, %s1936
          %s1938 = smul.addr %s17, 16
          %s1939 = scalar_lea.hbm %s3, %s1938
          %s1941 = sshll.u32 %s1931, 4
          %s1942 = int_to_ptr.vmem [resolvable:$true] %s1941
          %1944 = dma.vmem_to_hbm [thread:$0]  %s1942, 16, %s1939, %s1929
        $region36: #{tpu_custom_call.1} parent=31 // pred_fallthru
          _
      $region32: #{tpu_custom_call.1} parent=5 // pred_fallthru
        _
      %p1945 = scmp.le.s32.totalorder 2, %s12
      // Predicated region
      $region37: #{tpu_custom_call.1} parent=5 // pred_check
        %p1946 = pneg %p1945
      $region38: #{tpu_custom_call.1} parent=5 // pred_check_branch
        %1948 = sbr.rel (%p1946) target = $region40
      $region39: #{tpu_custom_call.1} parent=5 // pred_region
        %s1949 = ssub.s32 %s12, 2
        // Predicated region
        $region41: #{tpu_custom_call.1} parent=39 // pred_check
          %p1950 = pneg %p109
        $region42: #{tpu_custom_call.1} parent=39 // pred_check_branch
          %1952 = sbr.rel (%p1950) target = $region44
        $region43: #{tpu_custom_call.1} parent=39 // pred_region
          %s1953 = sand.u32 %s94, 1
          %s1954 = scalar_lea.sflag [#allocation3], %s1953
          %s1955 = sand.u32 %s94, 1
          %s1956 = scalar_lea.vmem [#allocation2], %s1955
          %1957 = dma.done %s1954, 16
        $region44: #{tpu_custom_call.1} parent=39 // pred_fallthru
          _
      $region40: #{tpu_custom_call.1} parent=5 // pred_fallthru
        _
    $region6: #{tpu_custom_call.1} parent=1 // loop_footer
      %s16 = sadd.s32 1, %s12
    $region7: #{tpu_custom_call.1} parent=1 // loop_footer_branch
      %11 = sbr.rel target = $region3
    $region8: #{tpu_custom_call.1} parent=1 // loop_exit
      _
    %1958 = vsyncpa [#allocation3], 1
    %s1959 = scalar_lea.sflag [#allocation3], 1
    %1960 = vsyncpa %s1959, 1

</llo_original>
